<compile_context>
chip_gen: v6e
topology: v6e:2x2x1
jax: 0.10.0
libtpu: 0.0.40
codegen_flags: <defaults>
</compile_context>

<pallas_src>
import functools

import jax
import jax.numpy as jnp
from jax.experimental import pallas as pl
from jax.experimental.pallas import tpu as pltpu

LANE = 128


def _round_up(x, m):
    return (x + m - 1) // m * m


def _pad_to(arr, shape):
    pads = [(0, s - d) for d, s in zip(arr.shape, shape)]
    return jnp.pad(arr, pads)


def _pick_tile(n_p, cap):
    """Largest multiple of 128 that divides n_p and is <= cap."""
    best = LANE
    t = LANE
    while t <= min(cap, n_p):
        if n_p % t == 0:
            best = t
        t += LANE
    return best


def _vmem_capacity():
    try:
        return int(pltpu.get_tpu_info().vmem_capacity_bytes)
    except Exception:
        return 64 << 20  # conservative (v7x per-core VMEM)


# ---------------------------------------------------------------------------
# Kernel 1: first-layer feature transform  h0 = x @ W0   (bf16 in / bf16 out)
# ---------------------------------------------------------------------------
def _xw_kernel(x_ref, w_ref, o_ref):
    o_ref[...] = jnp.dot(
        x_ref[...], w_ref[...], preferred_element_type=jnp.float32
    ).astype(o_ref.dtype)


def _xw(x_bf, w_bf, *, tile_m):
    n_p, c_in_p = x_bf.shape
    c_out_p = w_bf.shape[1]
    vmem_need = 2 * (tile_m * c_in_p * 2 + c_in_p * c_out_p * 2 + tile_m * c_out_p * 2)
    vmem_limit = int(min(max(2 * vmem_need, 8 << 20), 32 << 20))
    return pl.pallas_call(
        _xw_kernel,
        out_shape=jax.ShapeDtypeStruct((n_p, c_out_p), jnp.bfloat16),
        grid_spec=pltpu.PrefetchScalarGridSpec(
            num_scalar_prefetch=0,
            grid=(n_p // tile_m,),
            in_specs=[
                pl.BlockSpec((tile_m, c_in_p), lambda i: (i, 0)),
                pl.BlockSpec((c_in_p, c_out_p), lambda i: (0, 0)),
            ],
            out_specs=pl.BlockSpec((tile_m, c_out_p), lambda i: (i, 0)),
        ),
        compiler_params=pltpu.CompilerParams(
            dimension_semantics=("parallel",),
            vmem_limit_bytes=vmem_limit,
        ),
    )(x_bf, w_bf)


# ---------------------------------------------------------------------------
# Kernel 2: aggregation  acc = adj @ h + b   (M x K tiled, f32 accumulator)
#   fuse_next=True : output = relu(acc) @ W_next  (bf16)  -- next layer's x@W
#   fuse_next=False: output = acc                 (f32)   -- final layer
# ---------------------------------------------------------------------------
def _agg_kernel(*refs, fuse_next):
    if fuse_next:
        adj_ref, h_ref, b_ref, wn_ref, o_ref, acc_ref = refs
    else:
        adj_ref, h_ref, b_ref, o_ref, acc_ref = refs
    k = pl.program_id(1)

    @pl.when(k == 0)
    def _():
        # fold bias into accumulator init
        acc_ref[...] = jnp.broadcast_to(b_ref[...], acc_ref.shape)

    acc_ref[...] += jnp.dot(
        adj_ref[...], h_ref[...], preferred_element_type=jnp.float32
    )

    @pl.when(k == pl.num_programs(1) - 1)
    def _():
        if fuse_next:
            y = jnp.maximum(acc_ref[...], 0.0).astype(jnp.bfloat16)
            # dropout: identity (eval mode)
            o_ref[...] = jnp.dot(
                y, wn_ref[...], preferred_element_type=jnp.float32
            ).astype(o_ref.dtype)
        else:
            o_ref[...] = acc_ref[...].astype(o_ref.dtype)


def _agg(adj_bf16, h_bf16, b, w_next, *, tile_m, tile_k):
    n_p = adj_bf16.shape[0]
    c_out_p = h_bf16.shape[1]
    fuse_next = w_next is not None
    if fuse_next:
        c_o = w_next.shape[1]
        out_dtype = jnp.bfloat16
        out_bytes = 2
    else:
        c_o = c_out_p
        out_dtype = jnp.float32
        out_bytes = 4

    in_specs = [
        pl.BlockSpec((tile_m, tile_k), lambda i, k: (i, k)),    # adj (bf16)
        pl.BlockSpec((tile_k, c_out_p), lambda i, k: (k, 0)),   # h K-slab (bf16)
        pl.BlockSpec((1, c_out_p), lambda i, k: (0, 0)),        # bias (f32)
    ]
    args = [adj_bf16, h_bf16, b]
    if fuse_next:
        in_specs.append(pl.BlockSpec((c_out_p, c_o), lambda i, k: (0, 0)))  # W_next
        args.append(w_next)

    vmem_need = (
        2 * (tile_m * tile_k * 2 + tile_k * c_out_p * 2 + c_out_p * 4
             + (c_out_p * c_o * 2 if fuse_next else 0)
             + tile_m * c_o * out_bytes)
        + tile_m * c_out_p * 4
    )
    # cap at 40 MiB scoped: safe headroom even on v7x (64 MiB physical VMEM)
    vmem_limit = int(min(max(2 * vmem_need, 16 << 20), 40 << 20))

    kernel = functools.partial(_agg_kernel, fuse_next=fuse_next)
    return pl.pallas_call(
        kernel,
        out_shape=jax.ShapeDtypeStruct((n_p, c_o), out_dtype),
        grid_spec=pltpu.PrefetchScalarGridSpec(
            num_scalar_prefetch=0,
            grid=(n_p // tile_m, n_p // tile_k),
            in_specs=in_specs,
            out_specs=pl.BlockSpec((tile_m, c_o), lambda i, k: (i, 0)),
            scratch_shapes=[pltpu.VMEM((tile_m, c_out_p), jnp.float32)],
        ),
        compiler_params=pltpu.CompilerParams(
            dimension_semantics=("parallel", "arbitrary"),
            vmem_limit_bytes=vmem_limit,
        ),
    )(*args)


# ---------------------------------------------------------------------------
# Kernel 3: fused multi-layer forward for small graphs (adj resident in VMEM)
# ---------------------------------------------------------------------------
def _fused_kernel(*refs, num_layers):
    adj_ref, x_ref = refs[0], refs[1]
    o_ref = refs[2 + 2 * num_layers]
    adj = adj_ref[...]          # bf16, loaded once, reused every layer
    h = x_ref[...]              # bf16
    for li in range(num_layers):
        w = refs[2 + 2 * li][...]   # bf16
        b = refs[3 + 2 * li][...]   # f32
        t = jnp.dot(h, w, preferred_element_type=jnp.float32).astype(jnp.bfloat16)
        y = jnp.dot(adj, t, preferred_element_type=jnp.float32) + b
        if li != num_layers - 1:
            h = jnp.maximum(y, 0.0).astype(jnp.bfloat16)
            # dropout: identity (eval mode)
        else:
            o_ref[...] = y.astype(o_ref.dtype)


def _gcn_fused(adj_bf16, x_bf, params_p, *, vmem_limit):
    num_layers = len(params_p)
    n_p = x_bf.shape[0]
    c_out_p = params_p[-1][0].shape[1]

    flat = []
    in_specs = [
        pl.BlockSpec(adj_bf16.shape, lambda i: (0, 0)),
        pl.BlockSpec(x_bf.shape, lambda i: (0, 0)),
    ]
    for w_p, b_p in params_p:
        flat += [w_p, b_p]
        in_specs += [
            pl.BlockSpec(w_p.shape, lambda i: (0, 0)),
            pl.BlockSpec(b_p.shape, lambda i: (0, 0)),
        ]

    kernel = functools.partial(_fused_kernel, num_layers=num_layers)
    return pl.pallas_call(
        kernel,
        out_shape=jax.ShapeDtypeStruct((n_p, c_out_p), jnp.float32),
        grid_spec=pltpu.PrefetchScalarGridSpec(
            num_scalar_prefetch=0,
            grid=(1,),
            in_specs=in_specs,
            out_specs=pl.BlockSpec((n_p, c_out_p), lambda i: (0, 0)),
        ),
        compiler_params=pltpu.CompilerParams(vmem_limit_bytes=int(vmem_limit)),
    )(adj_bf16, x_bf, *flat)


# ---------------------------------------------------------------------------
# Forward wrapper: padding, dtype casts, path selection
# ---------------------------------------------------------------------------
def gcn_forward(x, adj, params, *, force_tiled=False, force_fused=False):
    """params: list of (W, b). ReLU (+ dropout=identity, eval) on all but last."""
    n, c_in = x.shape
    assert adj.shape == (n, n)
    assert params[0][0].shape[0] == c_in
    num_layers = len(params)

    # lane-dense channel padding
    dims = [c_in] + [w.shape[1] for (w, _) in params]
    dims_p = [_round_up(d, LANE) for d in dims]

    # pad nodes only to the 128 lane granularity; pick tiles as divisors of n_p
    n_p = _round_up(n, LANE)
    tile_m = _pick_tile(n_p, 1024)
    if tile_m == n_p and n_p >= 2 * LANE:
        tile_m = _pick_tile(n_p, n_p // 2)   # >=2 row tiles -> both megacore TCs busy
    tile_k = _pick_tile(n_p, 1024)

    # cast-then-pad (no padded f32 adj intermediate).  If adj is reused across
    # many forward calls, hoist this preprocessing out of the call.
    adj_bf16 = _pad_to(adj.astype(jnp.bfloat16), (n_p, n_p))
    x_bf = _pad_to(x.astype(jnp.bfloat16), (n_p, dims_p[0]))

    w_bf, b_f32 = [], []
    for li, (w, b) in enumerate(params):
        w_bf.append(_pad_to(w.astype(jnp.bfloat16), (dims_p[li], dims_p[li + 1])))
        b_f32.append(_pad_to(b.reshape(1, -1).astype(jnp.float32), (1, dims_p[li + 1])))

    # small-graph fused path selection (generation-aware VMEM budget)
    capacity = _vmem_capacity()
    cmax = max(dims_p)
    fused_est = (
        adj_bf16.size * 2 + x_bf.size * 2
        + sum(wp.size * 2 + bp.size * 4 for wp, bp in zip(w_bf, b_f32))
        + 3 * n_p * cmax * 4           # per-layer intermediates (t, dot result, h)
        + n_p * dims_p[-1] * 4         # output
    )
    use_fused = force_fused or ((not force_tiled) and fused_est <= int(0.35 * capacity))

    if use_fused:
        vmem_limit = min(int(0.75 * capacity), max(32 << 20, int(1.5 * fused_est)))
        out_p = _gcn_fused(adj_bf16, x_bf, list(zip(w_bf, b_f32)), vmem_limit=vmem_limit)
    else:
        h = _xw(x_bf, w_bf[0], tile_m=tile_m)                        # h0 = x @ W0
        for li in range(num_layers - 1):
            # emits relu(adj @ h + b_li) @ W_{li+1}  (next layer's transformed input)
            h = _agg(adj_bf16, h, b_f32[li], w_bf[li + 1],
                     tile_m=tile_m, tile_k=tile_k)
        out_p = _agg(adj_bf16, h, b_f32[-1], None, tile_m=tile_m, tile_k=tile_k)

    return out_p[:n, : dims[-1]]


# ---------------------------------------------------------------------------
# Init (matches PyTorch glorot / zeros)
# ---------------------------------------------------------------------------
def glorot(key, shape, dtype=jnp.float32):
    fan_in, fan_out = shape
    limit = (6.0 / (fan_in + fan_out)) ** 0.5
    return jax.random.uniform(key, shape, dtype, minval=-limit, maxval=limit)


def init_gcn_params(key, in_channels, hidden_channels, out_channels, num_layers):
    dims = [in_channels] + [hidden_channels] * (num_layers - 1) + [out_channels]
    params = []
    for li in range(num_layers):
        key, kw = jax.random.split(key)
        w = glorot(kw, (dims[li], dims[li + 1]))
        b = jnp.zeros((dims[li + 1],), jnp.float32)
        params.append((w, b))
    return params


if __name__ == "__main__":
    N = 256
    IN_CH, HIDDEN_CH, OUT_CH = 16, 32, 8
    NUM_LAYERS = 3

    key = jax.random.PRNGKey(0)
    kx, kadj, kp = jax.random.split(key, 3)

    x = jax.random.normal(kx, (N, IN_CH), jnp.float32)
    a = jax.random.uniform(kadj, (N, N), jnp.float32)
    adj = (a + a.T) / (2.0 * N)          # symmetric "normalized" dense adjacency

    params = init_gcn_params(kp, IN_CH, HIDDEN_CH, OUT_CH, NUM_LAYERS)

    fwd_fused = jax.jit(functools.partial(gcn_forward, force_tiled=False))
    fwd_tiled = jax.jit(functools.partial(gcn_forward, force_tiled=True))

    out_fused = jax.block_until_ready(fwd_fused(x, adj, params))
    out_tiled = jax.block_until_ready(fwd_tiled(x, adj, params))

    # Reference mirroring the kernels' precision flow (bf16 x/adj/W/activations,
    # f32 accumulation).
    def ref_forward_bf16(x, adj, params):
        adj_bf = adj.astype(jnp.bfloat16)
        h = x.astype(jnp.bfloat16)
        y = None
        for li, (w, b) in enumerate(params):
            w_bf = w.astype(jnp.bfloat16)
            t = jnp.dot(h, w_bf, preferred_element_type=jnp.float32).astype(jnp.bfloat16)
            y = jnp.dot(adj_bf, t, preferred_element_type=jnp.float32) + b.reshape(1, -1)
            if li != len(params) - 1:
                h = jnp.maximum(y, 0.0).astype(jnp.bfloat16)
        return y

    # Pure f32 reference (PyTorch math)
    def ref_forward_f32(x, adj, params):
        h = x
        for li, (w, b) in enumerate(params):
            h = adj @ h @ w + b.reshape(1, -1)
            if li != len(params) - 1:
                h = jnp.maximum(h, 0.0)
        return h

    ref_bf = ref_forward_bf16(x, adj, params)
    ref_f32 = ref_forward_f32(x, adj, params)

    assert out_fused.shape == (N, OUT_CH)
    assert out_tiled.shape == (N, OUT_CH)
    assert jnp.allclose(out_fused, ref_bf, atol=3e-3, rtol=3e-3)
    assert jnp.allclose(out_tiled, ref_bf, atol=3e-3, rtol=3e-3)
    assert jnp.allclose(out_fused, ref_f32, atol=5e-2, rtol=5e-2)
    assert jnp.allclose(out_tiled, ref_f32, atol=5e-2, rtol=5e-2)

    print("KERNEL_OK")
</pallas_src>

<mosaic_0001>
module attributes {stable_mosaic.version = 11 : i64} {
  func.func @_fused_kernel(%arg0: i32, %arg1: memref<256x256xbf16, #tpu.memory_space<vmem>>, %arg2: memref<256x128xbf16, #tpu.memory_space<vmem>>, %arg3: memref<128x128xbf16, #tpu.memory_space<vmem>>, %arg4: memref<1x128xf32, #tpu.memory_space<vmem>>, %arg5: memref<128x128xbf16, #tpu.memory_space<vmem>>, %arg6: memref<1x128xf32, #tpu.memory_space<vmem>>, %arg7: memref<128x128xbf16, #tpu.memory_space<vmem>>, %arg8: memref<1x128xf32, #tpu.memory_space<vmem>>, %arg9: memref<256x128xf32, #tpu.memory_space<vmem>>) attributes {dimension_semantics = [#tpu.dimension_semantics<arbitrary>], iteration_bounds = array<i64: 1>, scalar_prefetch = 0 : i64, scratch_operands = 0 : i64, tpu.core_type = #tpu.core_type<tc>, window_params = [{pipeline_mode = #tpu.pipeline_mode<synchronous>, transform_indices = @transform_0, window_bounds = array<i64: 256, 256>}, {pipeline_mode = #tpu.pipeline_mode<synchronous>, transform_indices = @transform_1, window_bounds = array<i64: 256, 128>}, {pipeline_mode = #tpu.pipeline_mode<synchronous>, transform_indices = @transform_2, window_bounds = array<i64: 128, 128>}, {pipeline_mode = #tpu.pipeline_mode<synchronous>, transform_indices = @transform_3, window_bounds = array<i64: 1, 128>}, {pipeline_mode = #tpu.pipeline_mode<synchronous>, transform_indices = @transform_4, window_bounds = array<i64: 128, 128>}, {pipeline_mode = #tpu.pipeline_mode<synchronous>, transform_indices = @transform_5, window_bounds = array<i64: 1, 128>}, {pipeline_mode = #tpu.pipeline_mode<synchronous>, transform_indices = @transform_6, window_bounds = array<i64: 128, 128>}, {pipeline_mode = #tpu.pipeline_mode<synchronous>, transform_indices = @transform_7, window_bounds = array<i64: 1, 128>}, {pipeline_mode = #tpu.pipeline_mode<synchronous>, transform_indices = @transform_8, window_bounds = array<i64: 256, 128>}]} {
    %c0 = arith.constant 0 : index
    %c0_0 = arith.constant 0 : index
    %0 = vector.load %arg1[%c0, %c0_0] : memref<256x256xbf16, #tpu.memory_space<vmem>>, vector<256x256xbf16>
    %c0_1 = arith.constant 0 : index
    %c0_2 = arith.constant 0 : index
    %1 = vector.load %arg2[%c0_1, %c0_2] : memref<256x128xbf16, #tpu.memory_space<vmem>>, vector<256x128xbf16>
    %c0_3 = arith.constant 0 : index
    %c0_4 = arith.constant 0 : index
    %2 = vector.load %arg3[%c0_3, %c0_4] : memref<128x128xbf16, #tpu.memory_space<vmem>>, vector<128x128xbf16>
    %c0_5 = arith.constant 0 : index
    %c0_6 = arith.constant 0 : index
    %3 = vector.load %arg4[%c0_5, %c0_6] : memref<1x128xf32, #tpu.memory_space<vmem>>, vector<1x128xf32>
    %cst = arith.constant dense<0.000000e+00> : vector<256x128xf32>
    %4 = tpu.matmul %1, %2, %cst {dimension_numbers = #tpu.dot_dimension_numbers<[1], [0], [0], [1], [0, 0, 1, 1], [], []>} : vector<256x128xbf16>, vector<128x128xbf16>, vector<256x128xf32> -> vector<256x128xf32>
    %5 = arith.truncf %4 : vector<256x128xf32> to vector<256x128xbf16>
    %cst_7 = arith.constant dense<0.000000e+00> : vector<256x128xf32>
    %6 = tpu.matmul %0, %5, %cst_7 {dimension_numbers = #tpu.dot_dimension_numbers<[1], [0], [0], [1], [0, 0, 1, 1], [], []>} : vector<256x256xbf16>, vector<256x128xbf16>, vector<256x128xf32> -> vector<256x128xf32>
    %7 = vector.broadcast %3 : vector<1x128xf32> to vector<256x128xf32>
    %8 = arith.addf %6, %7 : vector<256x128xf32>
    %cst_8 = arith.constant 0.000000e+00 : f32
    %9 = vector.broadcast %cst_8 : f32 to vector<256x128xf32>
    %10 = arith.maximumf %8, %9 : vector<256x128xf32>
    %11 = arith.truncf %10 : vector<256x128xf32> to vector<256x128xbf16>
    %c0_9 = arith.constant 0 : index
    %c0_10 = arith.constant 0 : index
    %12 = vector.load %arg5[%c0_9, %c0_10] : memref<128x128xbf16, #tpu.memory_space<vmem>>, vector<128x128xbf16>
    %c0_11 = arith.constant 0 : index
    %c0_12 = arith.constant 0 : index
    %13 = vector.load %arg6[%c0_11, %c0_12] : memref<1x128xf32, #tpu.memory_space<vmem>>, vector<1x128xf32>
    %cst_13 = arith.constant dense<0.000000e+00> : vector<256x128xf32>
    %14 = tpu.matmul %11, %12, %cst_13 {dimension_numbers = #tpu.dot_dimension_numbers<[1], [0], [0], [1], [0, 0, 1, 1], [], []>} : vector<256x128xbf16>, vector<128x128xbf16>, vector<256x128xf32> -> vector<256x128xf32>
    %15 = arith.truncf %14 : vector<256x128xf32> to vector<256x128xbf16>
    %cst_14 = arith.constant dense<0.000000e+00> : vector<256x128xf32>
    %16 = tpu.matmul %0, %15, %cst_14 {dimension_numbers = #tpu.dot_dimension_numbers<[1], [0], [0], [1], [0, 0, 1, 1], [], []>} : vector<256x256xbf16>, vector<256x128xbf16>, vector<256x128xf32> -> vector<256x128xf32>
    %17 = vector.broadcast %13 : vector<1x128xf32> to vector<256x128xf32>
    %18 = arith.addf %16, %17 : vector<256x128xf32>
    %cst_15 = arith.constant 0.000000e+00 : f32
    %19 = vector.broadcast %cst_15 : f32 to vector<256x128xf32>
    %20 = arith.maximumf %18, %19 : vector<256x128xf32>
    %21 = arith.truncf %20 : vector<256x128xf32> to vector<256x128xbf16>
    %c0_16 = arith.constant 0 : index
    %c0_17 = arith.constant 0 : index
    %22 = vector.load %arg7[%c0_16, %c0_17] : memref<128x128xbf16, #tpu.memory_space<vmem>>, vector<128x128xbf16>
    %c0_18 = arith.constant 0 : index
    %c0_19 = arith.constant 0 : index
    %23 = vector.load %arg8[%c0_18, %c0_19] : memref<1x128xf32, #tpu.memory_space<vmem>>, vector<1x128xf32>
    %cst_20 = arith.constant dense<0.000000e+00> : vector<256x128xf32>
    %24 = tpu.matmul %21, %22, %cst_20 {dimension_numbers = #tpu.dot_dimension_numbers<[1], [0], [0], [1], [0, 0, 1, 1], [], []>} : vector<256x128xbf16>, vector<128x128xbf16>, vector<256x128xf32> -> vector<256x128xf32>
    %25 = arith.truncf %24 : vector<256x128xf32> to vector<256x128xbf16>
    %cst_21 = arith.constant dense<0.000000e+00> : vector<256x128xf32>
    %26 = tpu.matmul %0, %25, %cst_21 {dimension_numbers = #tpu.dot_dimension_numbers<[1], [0], [0], [1], [0, 0, 1, 1], [], []>} : vector<256x256xbf16>, vector<256x128xbf16>, vector<256x128xf32> -> vector<256x128xf32>
    %27 = vector.broadcast %23 : vector<1x128xf32> to vector<256x128xf32>
    %28 = arith.addf %26, %27 : vector<256x128xf32>
    %c0_22 = arith.constant 0 : index
    %c0_23 = arith.constant 0 : index
    %29 = vector.load %arg9[%c0_22, %c0_23] : memref<256x128xf32, #tpu.memory_space<vmem>>, vector<256x128xf32>
    tpu.vector_store %arg9[%c0_22, %c0_23], %28 {strides = array<i32>} : memref<256x128xf32, #tpu.memory_space<vmem>>, vector<256x128xf32>,
    return
  }
  func.func @transform_0(%arg0: i32) -> (i32, i32) {
    %c0_i32 = arith.constant 0 : i32
    %c0_i32_0 = arith.constant 0 : i32
    %c0_i32_1 = arith.constant 0 : i32
    return %c0_i32, %c0_i32_0 : i32, i32
  }
  func.func @transform_1(%arg0: i32) -> (i32, i32) {
    %c0_i32 = arith.constant 0 : i32
    %c0_i32_0 = arith.constant 0 : i32
    %c0_i32_1 = arith.constant 0 : i32
    return %c0_i32, %c0_i32_0 : i32, i32
  }
  func.func @transform_2(%arg0: i32) -> (i32, i32) {
    %c0_i32 = arith.constant 0 : i32
    %c0_i32_0 = arith.constant 0 : i32
    %c0_i32_1 = arith.constant 0 : i32
    return %c0_i32, %c0_i32_0 : i32, i32
  }
  func.func @transform_3(%arg0: i32) -> (i32, i32) {
    %c0_i32 = arith.constant 0 : i32
    %c0_i32_0 = arith.constant 0 : i32
    %c0_i32_1 = arith.constant 0 : i32
    return %c0_i32, %c0_i32_0 : i32, i32
  }
  func.func @transform_4(%arg0: i32) -> (i32, i32) {
    %c0_i32 = arith.constant 0 : i32
    %c0_i32_0 = arith.constant 0 : i32
    %c0_i32_1 = arith.constant 0 : i32
    return %c0_i32, %c0_i32_0 : i32, i32
  }
  func.func @transform_5(%arg0: i32) -> (i32, i32) {
    %c0_i32 = arith.constant 0 : i32
    %c0_i32_0 = arith.constant 0 : i32
    %c0_i32_1 = arith.constant 0 : i32
    return %c0_i32, %c0_i32_0 : i32, i32
  }
  func.func @transform_6(%arg0: i32) -> (i32, i32) {
    %c0_i32 = arith.constant 0 : i32
    %c0_i32_0 = arith.constant 0 : i32
    %c0_i32_1 = arith.constant 0 : i32
    return %c0_i32, %c0_i32_0 : i32, i32
  }
  func.func @transform_7(%arg0: i32) -> (i32, i32) {
    %c0_i32 = arith.constant 0 : i32
    %c0_i32_0 = arith.constant 0 : i32
    %c0_i32_1 = arith.constant 0 : i32
    return %c0_i32, %c0_i32_0 : i32, i32
  }
  func.func @transform_8(%arg0: i32) -> (i32, i32) {
    %c0_i32 = arith.constant 0 : i32
    %c0_i32_0 = arith.constant 0 : i32
    %c0_i32_1 = arith.constant 0 : i32
    return %c0_i32, %c0_i32_0 : i32, i32
  }
}

</mosaic_0001>

<llo_original>
// kernel: gcn_forward.1
$region0: #{gcn_forward.1}
  #allocation0 [shape = 'u32[]', space=smem, size = 0x4, offset = 0x4, fixed_abs, tag = 'smem constant byte address 0x4 - core index']
  #allocation1 [shape = 'u32[144,128]{1,0:T(1,128)}', space=vmem, size = 0x12000, scoped, tag = 'internal scratch']
  %s0 = inlined_call_operand.vmem [shape: bf16[256,256], index: 0, kind: input, shape index: {}]
  %s1 = inlined_call_operand.vmem [shape: bf16[256,128], index: 1, kind: input, shape index: {}]
  %s2 = inlined_call_operand.vmem [shape: bf16[128,128], index: 2, kind: input, shape index: {}]
  %s3 = inlined_call_operand.vmem [shape: f32[1,128], index: 3, kind: input, shape index: {}]
  %s4 = inlined_call_operand.vmem [shape: bf16[128,128], index: 4, kind: input, shape index: {}]
  %s5 = inlined_call_operand.vmem [shape: f32[1,128], index: 5, kind: input, shape index: {}]
  %s6 = inlined_call_operand.vmem [shape: bf16[128,128], index: 6, kind: input, shape index: {}]
  %s7 = inlined_call_operand.vmem [shape: f32[1,128], index: 7, kind: input, shape index: {}]
  %s8 = inlined_call_operand.vmem [shape: f32[256,128], index: 8, kind: output, shape index: {}]
  %s9 = sld [smem:[#allocation0]]
  $region42: #{gcn_forward.1} parent=0
    _
  %s11 = ssub.s32 1, %s9
  %s12 = scalar_select 0, %s11, %s9
  // Predicated region
  $region2: #{gcn_forward.1} parent=0 // pred_check
    _
  $region3: #{gcn_forward.1} parent=0 // pred_check_branch
    %14 = sbr.rel (0) target = $region5
  $region4: #{gcn_forward.1} parent=0 // pred_region
    _
  $region5: #{gcn_forward.1} parent=0 // pred_fallthru
    _
  // Predicated region
  $region6: #{gcn_forward.1} parent=0 // pred_check
    _
  $region7: #{gcn_forward.1} parent=0 // pred_check_branch
    %16 = sbr.rel (0) target = $region9
  $region8: #{gcn_forward.1} parent=0 // pred_region
    _
  $region9: #{gcn_forward.1} parent=0 // pred_fallthru
    _
  // Predicated region
  $region10: #{gcn_forward.1} parent=0 // pred_check
    _
  $region11: #{gcn_forward.1} parent=0 // pred_check_branch
    %18 = sbr.rel (0) target = $region13
  $region12: #{gcn_forward.1} parent=0 // pred_region
    _
  $region13: #{gcn_forward.1} parent=0 // pred_fallthru
    _
  // Predicated region
  $region14: #{gcn_forward.1} parent=0 // pred_check
    _
  $region15: #{gcn_forward.1} parent=0 // pred_check_branch
    %20 = sbr.rel (0) target = $region17
  $region16: #{gcn_forward.1} parent=0 // pred_region
    _
  $region17: #{gcn_forward.1} parent=0 // pred_fallthru
    _
  // Predicated region
  $region18: #{gcn_forward.1} parent=0 // pred_check
    _
  $region19: #{gcn_forward.1} parent=0 // pred_check_branch
    %22 = sbr.rel (0) target = $region21
  $region20: #{gcn_forward.1} parent=0 // pred_region
    _
  $region21: #{gcn_forward.1} parent=0 // pred_fallthru
    _
  // Predicated region
  $region22: #{gcn_forward.1} parent=0 // pred_check
    _
  $region23: #{gcn_forward.1} parent=0 // pred_check_branch
    %24 = sbr.rel (0) target = $region25
  $region24: #{gcn_forward.1} parent=0 // pred_region
    _
  $region25: #{gcn_forward.1} parent=0 // pred_fallthru
    _
  // Predicated region
  $region26: #{gcn_forward.1} parent=0 // pred_check
    _
  $region27: #{gcn_forward.1} parent=0 // pred_check_branch
    %26 = sbr.rel (0) target = $region29
  $region28: #{gcn_forward.1} parent=0 // pred_region
    _
  $region29: #{gcn_forward.1} parent=0 // pred_fallthru
    _
  // Predicated region
  $region30: #{gcn_forward.1} parent=0 // pred_check
    _
  $region31: #{gcn_forward.1} parent=0 // pred_check_branch
    %28 = sbr.rel (0) target = $region33
  $region32: #{gcn_forward.1} parent=0 // pred_region
    _
  $region33: #{gcn_forward.1} parent=0 // pred_fallthru
    _
  %v30 = vld [vmem:[%s0] sm:$0xff]
  %v31 = vld [vmem:[%s0 + $0x8] sm:$0xff]
  %v32 = vld [vmem:[%s0 + $0x10] sm:$0xff]
  %v33 = vld [vmem:[%s0 + $0x18] sm:$0xff]
  %v34 = vld [vmem:[%s0 + $0x20] sm:$0xff]
  %v35 = vld [vmem:[%s0 + $0x28] sm:$0xff]
  %v36 = vld [vmem:[%s0 + $0x30] sm:$0xff]
  %v37 = vld [vmem:[%s0 + $0x38] sm:$0xff]
  %v38 = vld [vmem:[%s0 + $0x40] sm:$0xff]
  %v39 = vld [vmem:[%s0 + $0x48] sm:$0xff]
  %v40 = vld [vmem:[%s0 + $0x50] sm:$0xff]
  %v41 = vld [vmem:[%s0 + $0x58] sm:$0xff]
  %v42 = vld [vmem:[%s0 + $0x60] sm:$0xff]
  %v43 = vld [vmem:[%s0 + $0x68] sm:$0xff]
  %v44 = vld [vmem:[%s0 + $0x70] sm:$0xff]
  %v45 = vld [vmem:[%s0 + $0x78] sm:$0xff]
  %v46 = vld [vmem:[%s0 + $0x80] sm:$0xff]
  %v47 = vld [vmem:[%s0 + $0x88] sm:$0xff]
  %v48 = vld [vmem:[%s0 + $0x90] sm:$0xff]
  %v49 = vld [vmem:[%s0 + $0x98] sm:$0xff]
  %v50 = vld [vmem:[%s0 + $0xa0] sm:$0xff]
  %v51 = vld [vmem:[%s0 + $0xa8] sm:$0xff]
  %v52 = vld [vmem:[%s0 + $0xb0] sm:$0xff]
  %v53 = vld [vmem:[%s0 + $0xb8] sm:$0xff]
  %v54 = vld [vmem:[%s0 + $0xc0] sm:$0xff]
  %v55 = vld [vmem:[%s0 + $0xc8] sm:$0xff]
  %v56 = vld [vmem:[%s0 + $0xd0] sm:$0xff]
  %v57 = vld [vmem:[%s0 + $0xd8] sm:$0xff]
  %v58 = vld [vmem:[%s0 + $0xe0] sm:$0xff]
  %v59 = vld [vmem:[%s0 + $0xe8] sm:$0xff]
  %v60 = vld [vmem:[%s0 + $0xf0] sm:$0xff]
  %v61 = vld [vmem:[%s0 + $0xf8] sm:$0xff]
  %v62 = vld [vmem:[%s1] sm:$0xf]
  %v63 = vld [vmem:[%s1 + $0x4] sm:$0xf]
  %v64 = vld [vmem:[%s1 + $0x8] sm:$0xf]
  %v65 = vld [vmem:[%s1 + $0xc] sm:$0xf]
  %v66 = vld [vmem:[%s1 + $0x10] sm:$0xf]
  %v67 = vld [vmem:[%s1 + $0x14] sm:$0xf]
  %v68 = vld [vmem:[%s1 + $0x18] sm:$0xf]
  %v69 = vld [vmem:[%s1 + $0x1c] sm:$0xf]
  %v70 = vld [vmem:[%s1 + $0x20] sm:$0xf]
  %v71 = vld [vmem:[%s1 + $0x24] sm:$0xf]
  %v72 = vld [vmem:[%s1 + $0x28] sm:$0xf]
  %v73 = vld [vmem:[%s1 + $0x2c] sm:$0xf]
  %v74 = vld [vmem:[%s1 + $0x30] sm:$0xf]
  %v75 = vld [vmem:[%s1 + $0x34] sm:$0xf]
  %v76 = vld [vmem:[%s1 + $0x38] sm:$0xf]
  %v77 = vld [vmem:[%s1 + $0x3c] sm:$0xf]
  %v78 = vld [vmem:[%s1 + $0x40] sm:$0xf]
  %v79 = vld [vmem:[%s1 + $0x44] sm:$0xf]
  %v80 = vld [vmem:[%s1 + $0x48] sm:$0xf]
  %v81 = vld [vmem:[%s1 + $0x4c] sm:$0xf]
  %v82 = vld [vmem:[%s1 + $0x50] sm:$0xf]
  %v83 = vld [vmem:[%s1 + $0x54] sm:$0xf]
  %v84 = vld [vmem:[%s1 + $0x58] sm:$0xf]
  %v85 = vld [vmem:[%s1 + $0x5c] sm:$0xf]
  %v86 = vld [vmem:[%s1 + $0x60] sm:$0xf]
  %v87 = vld [vmem:[%s1 + $0x64] sm:$0xf]
  %v88 = vld [vmem:[%s1 + $0x68] sm:$0xf]
  %v89 = vld [vmem:[%s1 + $0x6c] sm:$0xf]
  %v90 = vld [vmem:[%s1 + $0x70] sm:$0xf]
  %v91 = vld [vmem:[%s1 + $0x74] sm:$0xf]
  %v92 = vld [vmem:[%s1 + $0x78] sm:$0xf]
  %v93 = vld [vmem:[%s1 + $0x7c] sm:$0xf]
  %v94 = vld [vmem:[%s2] sm:$0xf]
  %v95 = vld [vmem:[%s2 + $0x4] sm:$0xf]
  %v96 = vld [vmem:[%s2 + $0x8] sm:$0xf]
  %v97 = vld [vmem:[%s2 + $0xc] sm:$0xf]
  %v98 = vld [vmem:[%s2 + $0x10] sm:$0xf]
  %v99 = vld [vmem:[%s2 + $0x14] sm:$0xf]
  %v100 = vld [vmem:[%s2 + $0x18] sm:$0xf]
  %v101 = vld [vmem:[%s2 + $0x1c] sm:$0xf]
  %v102 = vld [vmem:[%s2 + $0x20] sm:$0xf]
  %v103 = vld [vmem:[%s2 + $0x24] sm:$0xf]
  %v104 = vld [vmem:[%s2 + $0x28] sm:$0xf]
  %v105 = vld [vmem:[%s2 + $0x2c] sm:$0xf]
  %v106 = vld [vmem:[%s2 + $0x30] sm:$0xf]
  %v107 = vld [vmem:[%s2 + $0x34] sm:$0xf]
  %v108 = vld [vmem:[%s2 + $0x38] sm:$0xf]
  %v109 = vld [vmem:[%s2 + $0x3c] sm:$0xf]
  %v110 = vld [vmem:[%s3] sm:$0x1]
  %v143 = vunpack.c.l.b16 %v62
  %v144 = vunpack.c.l.b16 %v63
  %v145 = vunpack.c.l.b16 %v64
  %v146 = vunpack.c.l.b16 %v65
  %v147 = vunpack.c.l.b16 %v66
  %v148 = vunpack.c.l.b16 %v67
  %v149 = vunpack.c.l.b16 %v68
  %v150 = vunpack.c.l.b16 %v69
  %v151 = vunpack.c.l.b16 %v70
  %v152 = vunpack.c.l.b16 %v71
  %v153 = vunpack.c.l.b16 %v72
  %v154 = vunpack.c.l.b16 %v73
  %v155 = vunpack.c.l.b16 %v74
  %v156 = vunpack.c.l.b16 %v75
  %v157 = vunpack.c.l.b16 %v76
  %v158 = vunpack.c.l.b16 %v77
  %v159 = vunpack.c.l.b16 %v78
  %v160 = vunpack.c.l.b16 %v79
  %v161 = vunpack.c.l.b16 %v80
  %v162 = vunpack.c.l.b16 %v81
  %v163 = vunpack.c.l.b16 %v82
  %v164 = vunpack.c.l.b16 %v83
  %v165 = vunpack.c.l.b16 %v84
  %v166 = vunpack.c.l.b16 %v85
  %v167 = vunpack.c.l.b16 %v86
  %v168 = vunpack.c.l.b16 %v87
  %v169 = vunpack.c.l.b16 %v88
  %v170 = vunpack.c.l.b16 %v89
  %v171 = vunpack.c.l.b16 %v90
  %v172 = vunpack.c.l.b16 %v91
  %v173 = vunpack.c.l.b16 %v92
  %v174 = vunpack.c.l.b16 %v93
  %v175 = vpack.c.b16 %v144, %v143
  %v176 = vpack.c.b16 %v146, %v145
  %v177 = vpack.c.b16 %v148, %v147
  %v178 = vpack.c.b16 %v150, %v149
  %v179 = vpack.c.b16 %v152, %v151
  %v180 = vpack.c.b16 %v154, %v153
  %v181 = vpack.c.b16 %v156, %v155
  %v182 = vpack.c.b16 %v158, %v157
  %v183 = vpack.c.b16 %v160, %v159
  %v184 = vpack.c.b16 %v162, %v161
  %v185 = vpack.c.b16 %v164, %v163
  %v186 = vpack.c.b16 %v166, %v165
  %v187 = vpack.c.b16 %v168, %v167
  %v188 = vpack.c.b16 %v170, %v169
  %v189 = vpack.c.b16 %v172, %v171
  %v190 = vpack.c.b16 %v174, %v173
  %v223 = vunpack.c.l.b16 %v94
  %v224 = vunpack.c.l.b16 %v95
  %v225 = vunpack.c.l.b16 %v96
  %v226 = vunpack.c.l.b16 %v97
  %v227 = vunpack.c.l.b16 %v98
  %v228 = vunpack.c.l.b16 %v99
  %v229 = vunpack.c.l.b16 %v100
  %v230 = vunpack.c.l.b16 %v101
  %v231 = vunpack.c.l.b16 %v102
  %v232 = vunpack.c.l.b16 %v103
  %v233 = vunpack.c.l.b16 %v104
  %v234 = vunpack.c.l.b16 %v105
  %v235 = vunpack.c.l.b16 %v106
  %v236 = vunpack.c.l.b16 %v107
  %v237 = vunpack.c.l.b16 %v108
  %v238 = vunpack.c.l.b16 %v109
  %v239 = vpack.c.b16 %v224, %v223
  %v240 = vpack.c.b16 %v226, %v225
  %v241 = vpack.c.b16 %v228, %v227
  %v242 = vpack.c.b16 %v230, %v229
  %v243 = vpack.c.b16 %v232, %v231
  %v244 = vpack.c.b16 %v234, %v233
  %v245 = vpack.c.b16 %v236, %v235
  %v246 = vpack.c.b16 %v238, %v237
  %255 = vmatprep.subr.bf16.mxu0 0
  %256 = vmatpush1.bf16.msra.mxu0 %v246
  %257 = vmatprep.subr.bf16.mxu0 0
  %258 = vmatpush1.bf16.msra.mxu0 %v245
  %259 = vmatprep.subr.bf16.mxu0 0
  %260 = vmatpush1.bf16.msra.mxu0 %v244
  %261 = vmatprep.subr.bf16.mxu0 0
  %262 = vmatpush1.bf16.msra.mxu0 %v243
  %263 = vmatprep.subr.bf16.mxu0 0
  %264 = vmatpush1.bf16.msra.mxu0 %v242
  %265 = vmatprep.subr.bf16.mxu0 0
  %266 = vmatpush1.bf16.msra.mxu0 %v241
  %267 = vmatprep.subr.bf16.mxu0 0
  %268 = vmatpush1.bf16.msra.mxu0 %v240
  %269 = vmatprep.subr.bf16.mxu0 0
  %270 = vmatpush1.bf16.msra.mxu0 %v239
  %271 = vmatprep.subr.bf16.mxu0 0
  %272 = vmatpush2.bf16.msra.mxu0 0
  %273 = vmatprep.subr.bf16.mxu0 0
  %274 = vmatpush2.bf16.msra.mxu0 0
  %275 = vmatprep.subr.bf16.mxu0 0
  %276 = vmatpush2.bf16.msra.mxu0 0
  %277 = vmatprep.subr.bf16.mxu0 0
  %278 = vmatpush2.bf16.msra.mxu0 0
  %279 = vmatprep.subr.bf16.mxu0 0
  %280 = vmatpush2.bf16.msra.mxu0 0
  %281 = vmatprep.subr.bf16.mxu0 0
  %282 = vmatpush2.bf16.msra.mxu0 0
  %283 = vmatprep.subr.bf16.mxu0 0
  %284 = vmatpush2.bf16.msra.mxu0 0
  %285 = vmatprep.subr.bf16.mxu0 0
  %286 = vmatpush2.bf16.msra.mxu0 0
  %287 = vmatprep.mubr.bf16.mxu0 0
  %288 = vmatmul.mubr.bf16.gmra.mxu0 %v175
  %v289 = vpop.f32.mrf.mxu0
  %v290 = vadd.f32 0.0, %v289
  %v291 = vpop.f32.mrf.mxu0
  %v292 = vpop.f32.mrf.mxu0
  %v293 = vadd.f32 0.0, %v292
  %v294 = vpop.f32.mrf.mxu0
  %295 = vmatprep.mubr.bf16.mxu0 0
  %296 = vmatmul.mubr.bf16.gmra.mxu0 %v176
  %v297 = vpop.f32.mrf.mxu0
  %v298 = vadd.f32 0.0, %v297
  %v299 = vpop.f32.mrf.mxu0
  %v300 = vpop.f32.mrf.mxu0
  %v301 = vadd.f32 0.0, %v300
  %v302 = vpop.f32.mrf.mxu0
  %303 = vmatprep.mubr.bf16.mxu0 0
  %304 = vmatmul.mubr.bf16.gmra.mxu0 %v177
  %v305 = vpop.f32.mrf.mxu0
  %v306 = vadd.f32 0.0, %v305
  %v307 = vpop.f32.mrf.mxu0
  %v308 = vpop.f32.mrf.mxu0
  %v309 = vadd.f32 0.0, %v308
  %v310 = vpop.f32.mrf.mxu0
  %311 = vmatprep.mubr.bf16.mxu0 0
  %312 = vmatmul.mubr.bf16.gmra.mxu0 %v178
  %v313 = vpop.f32.mrf.mxu0
  %v314 = vadd.f32 0.0, %v313
  %v315 = vpop.f32.mrf.mxu0
  %v316 = vpop.f32.mrf.mxu0
  %v317 = vadd.f32 0.0, %v316
  %v318 = vpop.f32.mrf.mxu0
  %319 = vmatprep.mubr.bf16.mxu0 0
  %320 = vmatmul.mubr.bf16.gmra.mxu0 %v179
  %v321 = vpop.f32.mrf.mxu0
  %v322 = vadd.f32 0.0, %v321
  %v323 = vpop.f32.mrf.mxu0
  %v324 = vpop.f32.mrf.mxu0
  %v325 = vadd.f32 0.0, %v324
  %v326 = vpop.f32.mrf.mxu0
  %327 = vmatprep.mubr.bf16.mxu0 0
  %328 = vmatmul.mubr.bf16.gmra.mxu0 %v180
  %v329 = vpop.f32.mrf.mxu0
  %v330 = vadd.f32 0.0, %v329
  %v331 = vpop.f32.mrf.mxu0
  %v332 = vpop.f32.mrf.mxu0
  %v333 = vadd.f32 0.0, %v332
  %v334 = vpop.f32.mrf.mxu0
  %335 = vmatprep.mubr.bf16.mxu0 0
  %336 = vmatmul.mubr.bf16.gmra.mxu0 %v181
  %v337 = vpop.f32.mrf.mxu0
  %v338 = vadd.f32 0.0, %v337
  %v339 = vpop.f32.mrf.mxu0
  %v340 = vpop.f32.mrf.mxu0
  %v341 = vadd.f32 0.0, %v340
  %v342 = vpop.f32.mrf.mxu0
  %343 = vmatprep.mubr.bf16.mxu0 0
  %344 = vmatmul.mubr.bf16.gmra.mxu0 %v182
  %v345 = vpop.f32.mrf.mxu0
  %v346 = vadd.f32 0.0, %v345
  %v347 = vpop.f32.mrf.mxu0
  %v348 = vpop.f32.mrf.mxu0
  %v349 = vadd.f32 0.0, %v348
  %v350 = vpop.f32.mrf.mxu0
  %351 = vmatprep.mubr.bf16.mxu0 0
  %352 = vmatmul.mubr.bf16.gmra.mxu0 %v183
  %v353 = vpop.f32.mrf.mxu0
  %v354 = vadd.f32 0.0, %v353
  %v355 = vpop.f32.mrf.mxu0
  %v356 = vpop.f32.mrf.mxu0
  %v357 = vadd.f32 0.0, %v356
  %v358 = vpop.f32.mrf.mxu0
  %359 = vmatprep.mubr.bf16.mxu0 0
  %360 = vmatmul.mubr.bf16.gmra.mxu0 %v184
  %v361 = vpop.f32.mrf.mxu0
  %v362 = vadd.f32 0.0, %v361
  %v363 = vpop.f32.mrf.mxu0
  %v364 = vpop.f32.mrf.mxu0
  %v365 = vadd.f32 0.0, %v364
  %v366 = vpop.f32.mrf.mxu0
  %367 = vmatprep.mubr.bf16.mxu0 0
  %368 = vmatmul.mubr.bf16.gmra.mxu0 %v185
  %v369 = vpop.f32.mrf.mxu0
  %v370 = vadd.f32 0.0, %v369
  %v371 = vpop.f32.mrf.mxu0
  %v372 = vpop.f32.mrf.mxu0
  %v373 = vadd.f32 0.0, %v372
  %v374 = vpop.f32.mrf.mxu0
  %375 = vmatprep.mubr.bf16.mxu0 0
  %376 = vmatmul.mubr.bf16.gmra.mxu0 %v186
  %v377 = vpop.f32.mrf.mxu0
  %v378 = vadd.f32 0.0, %v377
  %v379 = vpop.f32.mrf.mxu0
  %v380 = vpop.f32.mrf.mxu0
  %v381 = vadd.f32 0.0, %v380
  %v382 = vpop.f32.mrf.mxu0
  %383 = vmatprep.mubr.bf16.mxu0 0
  %384 = vmatmul.mubr.bf16.gmra.mxu0 %v187
  %v385 = vpop.f32.mrf.mxu0
  %v386 = vadd.f32 0.0, %v385
  %v387 = vpop.f32.mrf.mxu0
  %v388 = vpop.f32.mrf.mxu0
  %v389 = vadd.f32 0.0, %v388
  %v390 = vpop.f32.mrf.mxu0
  %391 = vmatprep.mubr.bf16.mxu0 0
  %392 = vmatmul.mubr.bf16.gmra.mxu0 %v188
  %v393 = vpop.f32.mrf.mxu0
  %v394 = vadd.f32 0.0, %v393
  %v395 = vpop.f32.mrf.mxu0
  %v396 = vpop.f32.mrf.mxu0
  %v397 = vadd.f32 0.0, %v396
  %v398 = vpop.f32.mrf.mxu0
  %399 = vmatprep.mubr.bf16.mxu0 0
  %400 = vmatmul.mubr.bf16.gmra.mxu0 %v189
  %v401 = vpop.f32.mrf.mxu0
  %v402 = vadd.f32 0.0, %v401
  %v403 = vpop.f32.mrf.mxu0
  %v404 = vpop.f32.mrf.mxu0
  %v405 = vadd.f32 0.0, %v404
  %v406 = vpop.f32.mrf.mxu0
  %407 = vmatprep.mubr.bf16.mxu0 0
  %408 = vmatmul.mubr.bf16.gmra.mxu0 %v190
  %v409 = vpop.f32.mrf.mxu0
  %v410 = vadd.f32 0.0, %v409
  %v411 = vpop.f32.mrf.mxu0
  %v412 = vpop.f32.mrf.mxu0
  %v413 = vadd.f32 0.0, %v412
  %v414 = vpop.f32.mrf.mxu0
  %415 = vdwg.mxu0
  %v416 = vpack.c.bf16 %v293, %v290
  %v417 = vpack.c.bf16 %v301, %v298
  %v418 = vpack.c.bf16 %v309, %v306
  %v419 = vpack.c.bf16 %v317, %v314
  %v420 = vpack.c.bf16 %v325, %v322
  %v421 = vpack.c.bf16 %v333, %v330
  %v422 = vpack.c.bf16 %v341, %v338
  %v423 = vpack.c.bf16 %v349, %v346
  %v424 = vpack.c.bf16 %v357, %v354
  %v425 = vpack.c.bf16 %v365, %v362
  %v426 = vpack.c.bf16 %v373, %v370
  %v427 = vpack.c.bf16 %v381, %v378
  %v428 = vpack.c.bf16 %v389, %v386
  %v429 = vpack.c.bf16 %v397, %v394
  %v430 = vpack.c.bf16 %v405, %v402
  %v431 = vpack.c.bf16 %v413, %v410
  %v433 = vlaneseq
  %v434 = vshrl.u32 %v433, 7
  %v435 = vsub.s32 0, %v434
  %v436 = vrot.slane %v110, %v435
  %v470 = vunpack.c.l.b16 %v30
  %v471 = vunpack.c.h.b16 %v30
  %v472 = vunpack.c.l.b16 %v31
  %v473 = vunpack.c.h.b16 %v31
  %v474 = vunpack.c.l.b16 %v32
  %v475 = vunpack.c.h.b16 %v32
  %v476 = vunpack.c.l.b16 %v33
  %v477 = vunpack.c.h.b16 %v33
  %v478 = vunpack.c.l.b16 %v34
  %v479 = vunpack.c.h.b16 %v34
  %v480 = vunpack.c.l.b16 %v35
  %v481 = vunpack.c.h.b16 %v35
  %v482 = vunpack.c.l.b16 %v36
  %v483 = vunpack.c.h.b16 %v36
  %v484 = vunpack.c.l.b16 %v37
  %v485 = vunpack.c.h.b16 %v37
  %v486 = vunpack.c.l.b16 %v38
  %v487 = vunpack.c.h.b16 %v38
  %v488 = vunpack.c.l.b16 %v39
  %v489 = vunpack.c.h.b16 %v39
  %v490 = vunpack.c.l.b16 %v40
  %v491 = vunpack.c.h.b16 %v40
  %v492 = vunpack.c.l.b16 %v41
  %v493 = vunpack.c.h.b16 %v41
  %v494 = vunpack.c.l.b16 %v42
  %v495 = vunpack.c.h.b16 %v42
  %v496 = vunpack.c.l.b16 %v43
  %v497 = vunpack.c.h.b16 %v43
  %v498 = vunpack.c.l.b16 %v44
  %v499 = vunpack.c.h.b16 %v44
  %v500 = vunpack.c.l.b16 %v45
  %v501 = vunpack.c.h.b16 %v45
  %v502 = vunpack.c.l.b16 %v46
  %v503 = vunpack.c.h.b16 %v46
  %v504 = vunpack.c.l.b16 %v47
  %v505 = vunpack.c.h.b16 %v47
  %v506 = vunpack.c.l.b16 %v48
  %v507 = vunpack.c.h.b16 %v48
  %v508 = vunpack.c.l.b16 %v49
  %v509 = vunpack.c.h.b16 %v49
  %v510 = vunpack.c.l.b16 %v50
  %v511 = vunpack.c.h.b16 %v50
  %v512 = vunpack.c.l.b16 %v51
  %v513 = vunpack.c.h.b16 %v51
  %v514 = vunpack.c.l.b16 %v52
  %v515 = vunpack.c.h.b16 %v52
  %v516 = vunpack.c.l.b16 %v53
  %v517 = vunpack.c.h.b16 %v53
  %v518 = vunpack.c.l.b16 %v54
  %v519 = vunpack.c.h.b16 %v54
  %v520 = vunpack.c.l.b16 %v55
  %v521 = vunpack.c.h.b16 %v55
  %v522 = vunpack.c.l.b16 %v56
  %v523 = vunpack.c.h.b16 %v56
  %v524 = vunpack.c.l.b16 %v57
  %v525 = vunpack.c.h.b16 %v57
  %v526 = vunpack.c.l.b16 %v58
  %v527 = vunpack.c.h.b16 %v58
  %v528 = vunpack.c.l.b16 %v59
  %v529 = vunpack.c.h.b16 %v59
  %v530 = vunpack.c.l.b16 %v60
  %v531 = vunpack.c.h.b16 %v60
  %v532 = vunpack.c.l.b16 %v61
  %v533 = vunpack.c.h.b16 %v61
  %v534 = vpack.c.b16 %v472, %v470
  %v535 = vpack.c.b16 %v473, %v471
  %v536 = vpack.c.b16 %v476, %v474
  %v537 = vpack.c.b16 %v477, %v475
  %v538 = vpack.c.b16 %v480, %v478
  %v539 = vpack.c.b16 %v481, %v479
  %v540 = vpack.c.b16 %v484, %v482
  %v541 = vpack.c.b16 %v485, %v483
  %v542 = vpack.c.b16 %v488, %v486
  %v543 = vpack.c.b16 %v489, %v487
  %v544 = vpack.c.b16 %v492, %v490
  %v545 = vpack.c.b16 %v493, %v491
  %v546 = vpack.c.b16 %v496, %v494
  %v547 = vpack.c.b16 %v497, %v495
  %v548 = vpack.c.b16 %v500, %v498
  %v549 = vpack.c.b16 %v501, %v499
  %v550 = vpack.c.b16 %v504, %v502
  %v551 = vpack.c.b16 %v505, %v503
  %v552 = vpack.c.b16 %v508, %v506
  %v553 = vpack.c.b16 %v509, %v507
  %v554 = vpack.c.b16 %v512, %v510
  %v555 = vpack.c.b16 %v513, %v511
  %v556 = vpack.c.b16 %v516, %v514
  %v557 = vpack.c.b16 %v517, %v515
  %v558 = vpack.c.b16 %v520, %v518
  %v559 = vpack.c.b16 %v521, %v519
  %v560 = vpack.c.b16 %v524, %v522
  %v561 = vpack.c.b16 %v525, %v523
  %v562 = vpack.c.b16 %v528, %v526
  %v563 = vpack.c.b16 %v529, %v527
  %v564 = vpack.c.b16 %v532, %v530
  %v565 = vpack.c.b16 %v533, %v531
  %598 = vmatprep.subr.bf16.mxu0 0
  %599 = vmatpush1.bf16.msra.mxu0 %v423
  %600 = vmatprep.subr.bf16.mxu0 0
  %601 = vmatpush1.bf16.msra.mxu0 %v422
  %602 = vmatprep.subr.bf16.mxu0 0
  %603 = vmatpush1.bf16.msra.mxu0 %v421
  %604 = vmatprep.subr.bf16.mxu0 0
  %605 = vmatpush1.bf16.msra.mxu0 %v420
  %606 = vmatprep.subr.bf16.mxu0 0
  %607 = vmatpush1.bf16.msra.mxu0 %v419
  %608 = vmatprep.subr.bf16.mxu0 0
  %609 = vmatpush1.bf16.msra.mxu0 %v418
  %610 = vmatprep.subr.bf16.mxu0 0
  %611 = vmatpush1.bf16.msra.mxu0 %v417
  %612 = vmatprep.subr.bf16.mxu0 0
  %613 = vmatpush1.bf16.msra.mxu0 %v416
  %614 = vmatprep.subr.bf16.mxu0 0
  %615 = vmatpush2.bf16.msra.mxu0 %v431
  %616 = vmatprep.subr.bf16.mxu0 0
  %617 = vmatpush2.bf16.msra.mxu0 %v430
  %618 = vmatprep.subr.bf16.mxu0 0
  %619 = vmatpush2.bf16.msra.mxu0 %v429
  %620 = vmatprep.subr.bf16.mxu0 0
  %621 = vmatpush2.bf16.msra.mxu0 %v428
  %622 = vmatprep.subr.bf16.mxu0 0
  %623 = vmatpush2.bf16.msra.mxu0 %v427
  %624 = vmatprep.subr.bf16.mxu0 0
  %625 = vmatpush2.bf16.msra.mxu0 %v426
  %626 = vmatprep.subr.bf16.mxu0 0
  %627 = vmatpush2.bf16.msra.mxu0 %v425
  %628 = vmatprep.subr.bf16.mxu0 0
  %629 = vmatpush2.bf16.msra.mxu0 %v424
  %630 = vmatprep.mubr.bf16.mxu0 %v535
  %631 = vmatmul.mubr.bf16.gmra.mxu0 %v534
  %v632 = vpop.f32.mrf.mxu0
  %v633 = vadd.f32 %v436, %v632
  %v634 = vpop.f32.mrf.mxu0
  %v635 = vpop.f32.mrf.mxu0
  %v636 = vadd.f32 %v436, %v635
  %v637 = vpop.f32.mrf.mxu0
  %638 = vmatprep.mubr.bf16.mxu0 %v537
  %639 = vmatmul.mubr.bf16.gmra.mxu0 %v536
  %v640 = vpop.f32.mrf.mxu0
  %v641 = vadd.f32 %v436, %v640
  %v642 = vpop.f32.mrf.mxu0
  %v643 = vpop.f32.mrf.mxu0
  %v644 = vadd.f32 %v436, %v643
  %v645 = vpop.f32.mrf.mxu0
  %646 = vmatprep.mubr.bf16.mxu0 %v539
  %647 = vmatmul.mubr.bf16.gmra.mxu0 %v538
  %v648 = vpop.f32.mrf.mxu0
  %v649 = vadd.f32 %v436, %v648
  %v650 = vpop.f32.mrf.mxu0
  %v651 = vpop.f32.mrf.mxu0
  %v652 = vadd.f32 %v436, %v651
  %v653 = vpop.f32.mrf.mxu0
  %654 = vmatprep.mubr.bf16.mxu0 %v541
  %655 = vmatmul.mubr.bf16.gmra.mxu0 %v540
  %v656 = vpop.f32.mrf.mxu0
  %v657 = vadd.f32 %v436, %v656
  %v658 = vpop.f32.mrf.mxu0
  %v659 = vpop.f32.mrf.mxu0
  %v660 = vadd.f32 %v436, %v659
  %v661 = vpop.f32.mrf.mxu0
  %662 = vmatprep.mubr.bf16.mxu0 %v543
  %663 = vmatmul.mubr.bf16.gmra.mxu0 %v542
  %v664 = vpop.f32.mrf.mxu0
  %v665 = vadd.f32 %v436, %v664
  %v666 = vpop.f32.mrf.mxu0
  %v667 = vpop.f32.mrf.mxu0
  %v668 = vadd.f32 %v436, %v667
  %v669 = vpop.f32.mrf.mxu0
  %670 = vmatprep.mubr.bf16.mxu0 %v545
  %671 = vmatmul.mubr.bf16.gmra.mxu0 %v544
  %v672 = vpop.f32.mrf.mxu0
  %v673 = vadd.f32 %v436, %v672
  %v674 = vpop.f32.mrf.mxu0
  %v675 = vpop.f32.mrf.mxu0
  %v676 = vadd.f32 %v436, %v675
  %v677 = vpop.f32.mrf.mxu0
  %678 = vmatprep.mubr.bf16.mxu0 %v547
  %679 = vmatmul.mubr.bf16.gmra.mxu0 %v546
  %v680 = vpop.f32.mrf.mxu0
  %v681 = vadd.f32 %v436, %v680
  %v682 = vpop.f32.mrf.mxu0
  %v683 = vpop.f32.mrf.mxu0
  %v684 = vadd.f32 %v436, %v683
  %v685 = vpop.f32.mrf.mxu0
  %686 = vmatprep.mubr.bf16.mxu0 %v549
  %687 = vmatmul.mubr.bf16.gmra.mxu0 %v548
  %v688 = vpop.f32.mrf.mxu0
  %v689 = vadd.f32 %v436, %v688
  %v690 = vpop.f32.mrf.mxu0
  %v691 = vpop.f32.mrf.mxu0
  %v692 = vadd.f32 %v436, %v691
  %v693 = vpop.f32.mrf.mxu0
  %694 = vmatprep.mubr.bf16.mxu0 %v551
  %695 = vmatmul.mubr.bf16.gmra.mxu0 %v550
  %v696 = vpop.f32.mrf.mxu0
  %v697 = vadd.f32 %v436, %v696
  %v698 = vpop.f32.mrf.mxu0
  %v699 = vpop.f32.mrf.mxu0
  %v700 = vadd.f32 %v436, %v699
  %v701 = vpop.f32.mrf.mxu0
  %702 = vmatprep.mubr.bf16.mxu0 %v553
  %703 = vmatmul.mubr.bf16.gmra.mxu0 %v552
  %v704 = vpop.f32.mrf.mxu0
  %v705 = vadd.f32 %v436, %v704
  %v706 = vpop.f32.mrf.mxu0
  %v707 = vpop.f32.mrf.mxu0
  %v708 = vadd.f32 %v436, %v707
  %v709 = vpop.f32.mrf.mxu0
  %710 = vmatprep.mubr.bf16.mxu0 %v555
  %711 = vmatmul.mubr.bf16.gmra.mxu0 %v554
  %v712 = vpop.f32.mrf.mxu0
  %v713 = vadd.f32 %v436, %v712
  %v714 = vpop.f32.mrf.mxu0
  %v715 = vpop.f32.mrf.mxu0
  %v716 = vadd.f32 %v436, %v715
  %v717 = vpop.f32.mrf.mxu0
  %718 = vmatprep.mubr.bf16.mxu0 %v557
  %719 = vmatmul.mubr.bf16.gmra.mxu0 %v556
  %v720 = vpop.f32.mrf.mxu0
  %v721 = vadd.f32 %v436, %v720
  %v722 = vpop.f32.mrf.mxu0
  %v723 = vpop.f32.mrf.mxu0
  %v724 = vadd.f32 %v436, %v723
  %v725 = vpop.f32.mrf.mxu0
  %726 = vmatprep.mubr.bf16.mxu0 %v559
  %727 = vmatmul.mubr.bf16.gmra.mxu0 %v558
  %v728 = vpop.f32.mrf.mxu0
  %v729 = vadd.f32 %v436, %v728
  %v730 = vpop.f32.mrf.mxu0
  %v731 = vpop.f32.mrf.mxu0
  %v732 = vadd.f32 %v436, %v731
  %v733 = vpop.f32.mrf.mxu0
  %734 = vmatprep.mubr.bf16.mxu0 %v561
  %735 = vmatmul.mubr.bf16.gmra.mxu0 %v560
  %v736 = vpop.f32.mrf.mxu0
  %v737 = vadd.f32 %v436, %v736
  %v738 = vpop.f32.mrf.mxu0
  %v739 = vpop.f32.mrf.mxu0
  %v740 = vadd.f32 %v436, %v739
  %v741 = vpop.f32.mrf.mxu0
  %742 = vmatprep.mubr.bf16.mxu0 %v563
  %743 = vmatmul.mubr.bf16.gmra.mxu0 %v562
  %v744 = vpop.f32.mrf.mxu0
  %v745 = vadd.f32 %v436, %v744
  %v746 = vpop.f32.mrf.mxu0
  %v747 = vpop.f32.mrf.mxu0
  %v748 = vadd.f32 %v436, %v747
  %v749 = vpop.f32.mrf.mxu0
  %750 = vmatprep.mubr.bf16.mxu0 %v565
  %751 = vmatmul.mubr.bf16.gmra.mxu0 %v564
  %v752 = vpop.f32.mrf.mxu0
  %v753 = vadd.f32 %v436, %v752
  %v754 = vpop.f32.mrf.mxu0
  %v755 = vpop.f32.mrf.mxu0
  %v756 = vadd.f32 %v436, %v755
  %v757 = vpop.f32.mrf.mxu0
  %758 = vdwg.mxu0
  %v759 = vmax.f32 %v633, 0.0
  %v760 = vmax.f32 %v636, 0.0
  %v761 = vmax.f32 %v641, 0.0
  %v762 = vmax.f32 %v644, 0.0
  %v763 = vmax.f32 %v649, 0.0
  %v764 = vmax.f32 %v652, 0.0
  %v765 = vmax.f32 %v657, 0.0
  %v766 = vmax.f32 %v660, 0.0
  %v767 = vmax.f32 %v665, 0.0
  %v768 = vmax.f32 %v668, 0.0
  %v769 = vmax.f32 %v673, 0.0
  %v770 = vmax.f32 %v676, 0.0
  %v771 = vmax.f32 %v681, 0.0
  %v772 = vmax.f32 %v684, 0.0
  %v773 = vmax.f32 %v689, 0.0
  %v774 = vmax.f32 %v692, 0.0
  %v775 = vmax.f32 %v697, 0.0
  %v776 = vmax.f32 %v700, 0.0
  %v777 = vmax.f32 %v705, 0.0
  %v778 = vmax.f32 %v708, 0.0
  %v779 = vmax.f32 %v713, 0.0
  %v780 = vmax.f32 %v716, 0.0
  %v781 = vmax.f32 %v721, 0.0
  %v782 = vmax.f32 %v724, 0.0
  %v783 = vmax.f32 %v729, 0.0
  %v784 = vmax.f32 %v732, 0.0
  %v785 = vmax.f32 %v737, 0.0
  %v786 = vmax.f32 %v740, 0.0
  %v787 = vmax.f32 %v745, 0.0
  %v788 = vmax.f32 %v748, 0.0
  %v789 = vmax.f32 %v753, 0.0
  %v790 = vmax.f32 %v756, 0.0
  %v791 = vpack.c.bf16 %v760, %v759
  %v792 = vpack.c.bf16 %v762, %v761
  %v793 = vpack.c.bf16 %v764, %v763
  %v794 = vpack.c.bf16 %v766, %v765
  %v795 = vpack.c.bf16 %v768, %v767
  %v796 = vpack.c.bf16 %v770, %v769
  %v797 = vpack.c.bf16 %v772, %v771
  %v798 = vpack.c.bf16 %v774, %v773
  %v799 = vpack.c.bf16 %v776, %v775
  %v800 = vpack.c.bf16 %v778, %v777
  %v801 = vpack.c.bf16 %v780, %v779
  %v802 = vpack.c.bf16 %v782, %v781
  %v803 = vpack.c.bf16 %v784, %v783
  %v804 = vpack.c.bf16 %v786, %v785
  %v805 = vpack.c.bf16 %v788, %v787
  %v806 = vpack.c.bf16 %v790, %v789
  %v807 = vld [vmem:[%s4] sm:$0xf]
  %v808 = vld [vmem:[%s4 + $0x4] sm:$0xf]
  %v809 = vld [vmem:[%s4 + $0x8] sm:$0xf]
  %v810 = vld [vmem:[%s4 + $0xc] sm:$0xf]
  %v811 = vld [vmem:[%s4 + $0x10] sm:$0xf]
  %v812 = vld [vmem:[%s4 + $0x14] sm:$0xf]
  %v813 = vld [vmem:[%s4 + $0x18] sm:$0xf]
  %v814 = vld [vmem:[%s4 + $0x1c] sm:$0xf]
  %v815 = vld [vmem:[%s4 + $0x20] sm:$0xf]
  %v816 = vld [vmem:[%s4 + $0x24] sm:$0xf]
  %v817 = vld [vmem:[%s4 + $0x28] sm:$0xf]
  %v818 = vld [vmem:[%s4 + $0x2c] sm:$0xf]
  %v819 = vld [vmem:[%s4 + $0x30] sm:$0xf]
  %v820 = vld [vmem:[%s4 + $0x34] sm:$0xf]
  %v821 = vld [vmem:[%s4 + $0x38] sm:$0xf]
  %v822 = vld [vmem:[%s4 + $0x3c] sm:$0xf]
  %v823 = vld [vmem:[%s5] sm:$0x1]
  %v840 = vunpack.c.l.b16 %v807
  %v841 = vunpack.c.l.b16 %v808
  %v842 = vunpack.c.l.b16 %v809
  %v843 = vunpack.c.l.b16 %v810
  %v844 = vunpack.c.l.b16 %v811
  %v845 = vunpack.c.l.b16 %v812
  %v846 = vunpack.c.l.b16 %v813
  %v847 = vunpack.c.l.b16 %v814
  %v848 = vunpack.c.l.b16 %v815
  %v849 = vunpack.c.l.b16 %v816
  %v850 = vunpack.c.l.b16 %v817
  %v851 = vunpack.c.l.b16 %v818
  %v852 = vunpack.c.l.b16 %v819
  %v853 = vunpack.c.l.b16 %v820
  %v854 = vunpack.c.l.b16 %v821
  %v855 = vunpack.c.l.b16 %v822
  %v856 = vpack.c.b16 %v841, %v840
  %v857 = vpack.c.b16 %v843, %v842
  %v858 = vpack.c.b16 %v845, %v844
  %v859 = vpack.c.b16 %v847, %v846
  %v860 = vpack.c.b16 %v849, %v848
  %v861 = vpack.c.b16 %v851, %v850
  %v862 = vpack.c.b16 %v853, %v852
  %v863 = vpack.c.b16 %v855, %v854
  %872 = vmatprep.subr.bf16.mxu0 0
  %873 = vmatpush1.bf16.msra.mxu0 %v863
  %874 = vmatprep.subr.bf16.mxu0 0
  %875 = vmatpush1.bf16.msra.mxu0 %v862
  %876 = vmatprep.subr.bf16.mxu0 0
  %877 = vmatpush1.bf16.msra.mxu0 %v861
  %878 = vmatprep.subr.bf16.mxu0 0
  %879 = vmatpush1.bf16.msra.mxu0 %v860
  %880 = vmatprep.subr.bf16.mxu0 0
  %881 = vmatpush1.bf16.msra.mxu0 %v859
  %882 = vmatprep.subr.bf16.mxu0 0
  %883 = vmatpush1.bf16.msra.mxu0 %v858
  %884 = vmatprep.subr.bf16.mxu0 0
  %885 = vmatpush1.bf16.msra.mxu0 %v857
  %886 = vmatprep.subr.bf16.mxu0 0
  %887 = vmatpush1.bf16.msra.mxu0 %v856
  %888 = vmatprep.subr.bf16.mxu0 0
  %889 = vmatpush2.bf16.msra.mxu0 0
  %890 = vmatprep.subr.bf16.mxu0 0
  %891 = vmatpush2.bf16.msra.mxu0 0
  %892 = vmatprep.subr.bf16.mxu0 0
  %893 = vmatpush2.bf16.msra.mxu0 0
  %894 = vmatprep.subr.bf16.mxu0 0
  %895 = vmatpush2.bf16.msra.mxu0 0
  %896 = vmatprep.subr.bf16.mxu0 0
  %897 = vmatpush2.bf16.msra.mxu0 0
  %898 = vmatprep.subr.bf16.mxu0 0
  %899 = vmatpush2.bf16.msra.mxu0 0
  %900 = vmatprep.subr.bf16.mxu0 0
  %901 = vmatpush2.bf16.msra.mxu0 0
  %902 = vmatprep.subr.bf16.mxu0 0
  %903 = vmatpush2.bf16.msra.mxu0 0
  %904 = vmatprep.mubr.bf16.mxu0 0
  %905 = vmatmul.mubr.bf16.gmra.mxu0 %v791
  %v906 = vpop.f32.mrf.mxu0
  %v907 = vadd.f32 0.0, %v906
  %v908 = vpop.f32.mrf.mxu0
  %v909 = vpop.f32.mrf.mxu0
  %v910 = vadd.f32 0.0, %v909
  %v911 = vpop.f32.mrf.mxu0
  %912 = vmatprep.mubr.bf16.mxu0 0
  %913 = vmatmul.mubr.bf16.gmra.mxu0 %v792
  %v914 = vpop.f32.mrf.mxu0
  %v915 = vadd.f32 0.0, %v914
  %v916 = vpop.f32.mrf.mxu0
  %v917 = vpop.f32.mrf.mxu0
  %v918 = vadd.f32 0.0, %v917
  %v919 = vpop.f32.mrf.mxu0
  %920 = vmatprep.mubr.bf16.mxu0 0
  %921 = vmatmul.mubr.bf16.gmra.mxu0 %v793
  %v922 = vpop.f32.mrf.mxu0
  %v923 = vadd.f32 0.0, %v922
  %v924 = vpop.f32.mrf.mxu0
  %v925 = vpop.f32.mrf.mxu0
  %v926 = vadd.f32 0.0, %v925
  %v927 = vpop.f32.mrf.mxu0
  %928 = vmatprep.mubr.bf16.mxu0 0
  %929 = vmatmul.mubr.bf16.gmra.mxu0 %v794
  %v930 = vpop.f32.mrf.mxu0
  %v931 = vadd.f32 0.0, %v930
  %v932 = vpop.f32.mrf.mxu0
  %v933 = vpop.f32.mrf.mxu0
  %v934 = vadd.f32 0.0, %v933
  %v935 = vpop.f32.mrf.mxu0
  %936 = vmatprep.mubr.bf16.mxu0 0
  %937 = vmatmul.mubr.bf16.gmra.mxu0 %v795
  %v938 = vpop.f32.mrf.mxu0
  %v939 = vadd.f32 0.0, %v938
  %v940 = vpop.f32.mrf.mxu0
  %v941 = vpop.f32.mrf.mxu0
  %v942 = vadd.f32 0.0, %v941
  %v943 = vpop.f32.mrf.mxu0
  %944 = vmatprep.mubr.bf16.mxu0 0
  %945 = vmatmul.mubr.bf16.gmra.mxu0 %v796
  %v946 = vpop.f32.mrf.mxu0
  %v947 = vadd.f32 0.0, %v946
  %v948 = vpop.f32.mrf.mxu0
  %v949 = vpop.f32.mrf.mxu0
  %v950 = vadd.f32 0.0, %v949
  %v951 = vpop.f32.mrf.mxu0
  %952 = vmatprep.mubr.bf16.mxu0 0
  %953 = vmatmul.mubr.bf16.gmra.mxu0 %v797
  %v954 = vpop.f32.mrf.mxu0
  %v955 = vadd.f32 0.0, %v954
  %v956 = vpop.f32.mrf.mxu0
  %v957 = vpop.f32.mrf.mxu0
  %v958 = vadd.f32 0.0, %v957
  %v959 = vpop.f32.mrf.mxu0
  %960 = vmatprep.mubr.bf16.mxu0 0
  %961 = vmatmul.mubr.bf16.gmra.mxu0 %v798
  %v962 = vpop.f32.mrf.mxu0
  %v963 = vadd.f32 0.0, %v962
  %v964 = vpop.f32.mrf.mxu0
  %v965 = vpop.f32.mrf.mxu0
  %v966 = vadd.f32 0.0, %v965
  %v967 = vpop.f32.mrf.mxu0
  %968 = vmatprep.mubr.bf16.mxu0 0
  %969 = vmatmul.mubr.bf16.gmra.mxu0 %v799
  %v970 = vpop.f32.mrf.mxu0
  %v971 = vadd.f32 0.0, %v970
  %v972 = vpop.f32.mrf.mxu0
  %v973 = vpop.f32.mrf.mxu0
  %v974 = vadd.f32 0.0, %v973
  %v975 = vpop.f32.mrf.mxu0
  %976 = vmatprep.mubr.bf16.mxu0 0
  %977 = vmatmul.mubr.bf16.gmra.mxu0 %v800
  %v978 = vpop.f32.mrf.mxu0
  %v979 = vadd.f32 0.0, %v978
  %v980 = vpop.f32.mrf.mxu0
  %v981 = vpop.f32.mrf.mxu0
  %v982 = vadd.f32 0.0, %v981
  %v983 = vpop.f32.mrf.mxu0
  %984 = vmatprep.mubr.bf16.mxu0 0
  %985 = vmatmul.mubr.bf16.gmra.mxu0 %v801
  %v986 = vpop.f32.mrf.mxu0
  %v987 = vadd.f32 0.0, %v986
  %v988 = vpop.f32.mrf.mxu0
  %v989 = vpop.f32.mrf.mxu0
  %v990 = vadd.f32 0.0, %v989
  %v991 = vpop.f32.mrf.mxu0
  %992 = vmatprep.mubr.bf16.mxu0 0
  %993 = vmatmul.mubr.bf16.gmra.mxu0 %v802
  %v994 = vpop.f32.mrf.mxu0
  %v995 = vadd.f32 0.0, %v994
  %v996 = vpop.f32.mrf.mxu0
  %v997 = vpop.f32.mrf.mxu0
  %v998 = vadd.f32 0.0, %v997
  %v999 = vpop.f32.mrf.mxu0
  %1000 = vmatprep.mubr.bf16.mxu0 0
  %1001 = vmatmul.mubr.bf16.gmra.mxu0 %v803
  %v1002 = vpop.f32.mrf.mxu0
  %v1003 = vadd.f32 0.0, %v1002
  %v1004 = vpop.f32.mrf.mxu0
  %v1005 = vpop.f32.mrf.mxu0
  %v1006 = vadd.f32 0.0, %v1005
  %v1007 = vpop.f32.mrf.mxu0
  %1008 = vmatprep.mubr.bf16.mxu0 0
  %1009 = vmatmul.mubr.bf16.gmra.mxu0 %v804
  %v1010 = vpop.f32.mrf.mxu0
  %v1011 = vadd.f32 0.0, %v1010
  %v1012 = vpop.f32.mrf.mxu0
  %v1013 = vpop.f32.mrf.mxu0
  %v1014 = vadd.f32 0.0, %v1013
  %v1015 = vpop.f32.mrf.mxu0
  %1016 = vmatprep.mubr.bf16.mxu0 0
  %1017 = vmatmul.mubr.bf16.gmra.mxu0 %v805
  %v1018 = vpop.f32.mrf.mxu0
  %v1019 = vadd.f32 0.0, %v1018
  %v1020 = vpop.f32.mrf.mxu0
  %v1021 = vpop.f32.mrf.mxu0
  %v1022 = vadd.f32 0.0, %v1021
  %v1023 = vpop.f32.mrf.mxu0
  %1024 = vmatprep.mubr.bf16.mxu0 0
  %1025 = vmatmul.mubr.bf16.gmra.mxu0 %v806
  %v1026 = vpop.f32.mrf.mxu0
  %v1027 = vadd.f32 0.0, %v1026
  %v1028 = vpop.f32.mrf.mxu0
  %v1029 = vpop.f32.mrf.mxu0
  %v1030 = vadd.f32 0.0, %v1029
  %v1031 = vpop.f32.mrf.mxu0
  %1032 = vdwg.mxu0
  %v1033 = vpack.c.bf16 %v910, %v907
  %v1034 = vpack.c.bf16 %v918, %v915
  %v1035 = vpack.c.bf16 %v926, %v923
  %v1036 = vpack.c.bf16 %v934, %v931
  %v1037 = vpack.c.bf16 %v942, %v939
  %v1038 = vpack.c.bf16 %v950, %v947
  %v1039 = vpack.c.bf16 %v958, %v955
  %v1040 = vpack.c.bf16 %v966, %v963
  %v1041 = vpack.c.bf16 %v974, %v971
  %v1042 = vpack.c.bf16 %v982, %v979
  %v1043 = vpack.c.bf16 %v990, %v987
  %v1044 = vpack.c.bf16 %v998, %v995
  %v1045 = vpack.c.bf16 %v1006, %v1003
  %v1046 = vpack.c.bf16 %v1014, %v1011
  %v1047 = vpack.c.bf16 %v1022, %v1019
  %v1048 = vpack.c.bf16 %v1030, %v1027
  %v1050 = vlaneseq
  %v1051 = vshrl.u32 %v1050, 7
  %v1052 = vsub.s32 0, %v1051
  %v1053 = vrot.slane %v823, %v1052
  %1055 = vmatprep.subr.bf16.mxu0 0
  %1056 = vmatpush1.bf16.msra.mxu0 %v1040
  %1057 = vmatprep.subr.bf16.mxu0 0
  %1058 = vmatpush1.bf16.msra.mxu0 %v1039
  %1059 = vmatprep.subr.bf16.mxu0 0
  %1060 = vmatpush1.bf16.msra.mxu0 %v1038
  %1061 = vmatprep.subr.bf16.mxu0 0
  %1062 = vmatpush1.bf16.msra.mxu0 %v1037
  %1063 = vmatprep.subr.bf16.mxu0 0
  %1064 = vmatpush1.bf16.msra.mxu0 %v1036
  %1065 = vmatprep.subr.bf16.mxu0 0
  %1066 = vmatpush1.bf16.msra.mxu0 %v1035
  %1067 = vmatprep.subr.bf16.mxu0 0
  %1068 = vmatpush1.bf16.msra.mxu0 %v1034
  %1069 = vmatprep.subr.bf16.mxu0 0
  %1070 = vmatpush1.bf16.msra.mxu0 %v1033
  %1071 = vmatprep.subr.bf16.mxu0 0
  %1072 = vmatpush2.bf16.msra.mxu0 %v1048
  %1073 = vmatprep.subr.bf16.mxu0 0
  %1074 = vmatpush2.bf16.msra.mxu0 %v1047
  %1075 = vmatprep.subr.bf16.mxu0 0
  %1076 = vmatpush2.bf16.msra.mxu0 %v1046
  %1077 = vmatprep.subr.bf16.mxu0 0
  %1078 = vmatpush2.bf16.msra.mxu0 %v1045
  %1079 = vmatprep.subr.bf16.mxu0 0
  %1080 = vmatpush2.bf16.msra.mxu0 %v1044
  %1081 = vmatprep.subr.bf16.mxu0 0
  %1082 = vmatpush2.bf16.msra.mxu0 %v1043
  %1083 = vmatprep.subr.bf16.mxu0 0
  %1084 = vmatpush2.bf16.msra.mxu0 %v1042
  %1085 = vmatprep.subr.bf16.mxu0 0
  %1086 = vmatpush2.bf16.msra.mxu0 %v1041
  %1087 = vmatprep.mubr.bf16.mxu0 %v535
  %1088 = vmatmul.mubr.bf16.gmra.mxu0 %v534
  %v1089 = vpop.f32.mrf.mxu0
  %v1090 = vadd.f32 %v1053, %v1089
  %v1091 = vpop.f32.mrf.mxu0
  %v1092 = vpop.f32.mrf.mxu0
  %v1093 = vadd.f32 %v1053, %v1092
  %v1094 = vpop.f32.mrf.mxu0
  %1095 = vmatprep.mubr.bf16.mxu0 %v537
  %1096 = vmatmul.mubr.bf16.gmra.mxu0 %v536
  %v1097 = vpop.f32.mrf.mxu0
  %v1098 = vadd.f32 %v1053, %v1097
  %v1099 = vpop.f32.mrf.mxu0
  %v1100 = vpop.f32.mrf.mxu0
  %v1101 = vadd.f32 %v1053, %v1100
  %v1102 = vpop.f32.mrf.mxu0
  %1103 = vmatprep.mubr.bf16.mxu0 %v539
  %1104 = vmatmul.mubr.bf16.gmra.mxu0 %v538
  %v1105 = vpop.f32.mrf.mxu0
  %v1106 = vadd.f32 %v1053, %v1105
  %v1107 = vpop.f32.mrf.mxu0
  %v1108 = vpop.f32.mrf.mxu0
  %v1109 = vadd.f32 %v1053, %v1108
  %v1110 = vpop.f32.mrf.mxu0
  %1111 = vmatprep.mubr.bf16.mxu0 %v541
  %1112 = vmatmul.mubr.bf16.gmra.mxu0 %v540
  %v1113 = vpop.f32.mrf.mxu0
  %v1114 = vadd.f32 %v1053, %v1113
  %v1115 = vpop.f32.mrf.mxu0
  %v1116 = vpop.f32.mrf.mxu0
  %v1117 = vadd.f32 %v1053, %v1116
  %v1118 = vpop.f32.mrf.mxu0
  %1119 = vmatprep.mubr.bf16.mxu0 %v543
  %1120 = vmatmul.mubr.bf16.gmra.mxu0 %v542
  %v1121 = vpop.f32.mrf.mxu0
  %v1122 = vadd.f32 %v1053, %v1121
  %v1123 = vpop.f32.mrf.mxu0
  %v1124 = vpop.f32.mrf.mxu0
  %v1125 = vadd.f32 %v1053, %v1124
  %v1126 = vpop.f32.mrf.mxu0
  %1127 = vmatprep.mubr.bf16.mxu0 %v545
  %1128 = vmatmul.mubr.bf16.gmra.mxu0 %v544
  %v1129 = vpop.f32.mrf.mxu0
  %v1130 = vadd.f32 %v1053, %v1129
  %v1131 = vpop.f32.mrf.mxu0
  %v1132 = vpop.f32.mrf.mxu0
  %v1133 = vadd.f32 %v1053, %v1132
  %v1134 = vpop.f32.mrf.mxu0
  %1135 = vmatprep.mubr.bf16.mxu0 %v547
  %1136 = vmatmul.mubr.bf16.gmra.mxu0 %v546
  %v1137 = vpop.f32.mrf.mxu0
  %v1138 = vadd.f32 %v1053, %v1137
  %v1139 = vpop.f32.mrf.mxu0
  %v1140 = vpop.f32.mrf.mxu0
  %v1141 = vadd.f32 %v1053, %v1140
  %v1142 = vpop.f32.mrf.mxu0
  %1143 = vmatprep.mubr.bf16.mxu0 %v549
  %1144 = vmatmul.mubr.bf16.gmra.mxu0 %v548
  %v1145 = vpop.f32.mrf.mxu0
  %v1146 = vadd.f32 %v1053, %v1145
  %v1147 = vpop.f32.mrf.mxu0
  %v1148 = vpop.f32.mrf.mxu0
  %v1149 = vadd.f32 %v1053, %v1148
  %v1150 = vpop.f32.mrf.mxu0
  %1151 = vmatprep.mubr.bf16.mxu0 %v551
  %1152 = vmatmul.mubr.bf16.gmra.mxu0 %v550
  %v1153 = vpop.f32.mrf.mxu0
  %v1154 = vadd.f32 %v1053, %v1153
  %v1155 = vpop.f32.mrf.mxu0
  %v1156 = vpop.f32.mrf.mxu0
  %v1157 = vadd.f32 %v1053, %v1156
  %v1158 = vpop.f32.mrf.mxu0
  %1159 = vmatprep.mubr.bf16.mxu0 %v553
  %1160 = vmatmul.mubr.bf16.gmra.mxu0 %v552
  %v1161 = vpop.f32.mrf.mxu0
  %v1162 = vadd.f32 %v1053, %v1161
  %v1163 = vpop.f32.mrf.mxu0
  %v1164 = vpop.f32.mrf.mxu0
  %v1165 = vadd.f32 %v1053, %v1164
  %v1166 = vpop.f32.mrf.mxu0
  %1167 = vmatprep.mubr.bf16.mxu0 %v555
  %1168 = vmatmul.mubr.bf16.gmra.mxu0 %v554
  %v1169 = vpop.f32.mrf.mxu0
  %v1170 = vadd.f32 %v1053, %v1169
  %v1171 = vpop.f32.mrf.mxu0
  %v1172 = vpop.f32.mrf.mxu0
  %v1173 = vadd.f32 %v1053, %v1172
  %v1174 = vpop.f32.mrf.mxu0
  %1175 = vmatprep.mubr.bf16.mxu0 %v557
  %1176 = vmatmul.mubr.bf16.gmra.mxu0 %v556
  %v1177 = vpop.f32.mrf.mxu0
  %v1178 = vadd.f32 %v1053, %v1177
  %v1179 = vpop.f32.mrf.mxu0
  %v1180 = vpop.f32.mrf.mxu0
  %v1181 = vadd.f32 %v1053, %v1180
  %v1182 = vpop.f32.mrf.mxu0
  %1183 = vmatprep.mubr.bf16.mxu0 %v559
  %1184 = vmatmul.mubr.bf16.gmra.mxu0 %v558
  %v1185 = vpop.f32.mrf.mxu0
  %v1186 = vadd.f32 %v1053, %v1185
  %v1187 = vpop.f32.mrf.mxu0
  %v1188 = vpop.f32.mrf.mxu0
  %v1189 = vadd.f32 %v1053, %v1188
  %v1190 = vpop.f32.mrf.mxu0
  %1191 = vmatprep.mubr.bf16.mxu0 %v561
  %1192 = vmatmul.mubr.bf16.gmra.mxu0 %v560
  %v1193 = vpop.f32.mrf.mxu0
  %v1194 = vadd.f32 %v1053, %v1193
  %v1195 = vpop.f32.mrf.mxu0
  %v1196 = vpop.f32.mrf.mxu0
  %v1197 = vadd.f32 %v1053, %v1196
  %v1198 = vpop.f32.mrf.mxu0
  %1199 = vmatprep.mubr.bf16.mxu0 %v563
  %1200 = vmatmul.mubr.bf16.gmra.mxu0 %v562
  %v1201 = vpop.f32.mrf.mxu0
  %v1202 = vadd.f32 %v1053, %v1201
  %v1203 = vpop.f32.mrf.mxu0
  %v1204 = vpop.f32.mrf.mxu0
  %v1205 = vadd.f32 %v1053, %v1204
  %v1206 = vpop.f32.mrf.mxu0
  %1207 = vmatprep.mubr.bf16.mxu0 %v565
  %1208 = vmatmul.mubr.bf16.gmra.mxu0 %v564
  %v1209 = vpop.f32.mrf.mxu0
  %v1210 = vadd.f32 %v1053, %v1209
  %v1211 = vpop.f32.mrf.mxu0
  %v1212 = vpop.f32.mrf.mxu0
  %v1213 = vadd.f32 %v1053, %v1212
  %v1214 = vpop.f32.mrf.mxu0
  %1215 = vdwg.mxu0
  %v1216 = vmax.f32 %v1090, 0.0
  %v1217 = vmax.f32 %v1093, 0.0
  %v1218 = vmax.f32 %v1098, 0.0
  %v1219 = vmax.f32 %v1101, 0.0
  %v1220 = vmax.f32 %v1106, 0.0
  %v1221 = vmax.f32 %v1109, 0.0
  %v1222 = vmax.f32 %v1114, 0.0
  %v1223 = vmax.f32 %v1117, 0.0
  %v1224 = vmax.f32 %v1122, 0.0
  %v1225 = vmax.f32 %v1125, 0.0
  %v1226 = vmax.f32 %v1130, 0.0
  %v1227 = vmax.f32 %v1133, 0.0
  %v1228 = vmax.f32 %v1138, 0.0
  %v1229 = vmax.f32 %v1141, 0.0
  %v1230 = vmax.f32 %v1146, 0.0
  %v1231 = vmax.f32 %v1149, 0.0
  %v1232 = vmax.f32 %v1154, 0.0
  %v1233 = vmax.f32 %v1157, 0.0
  %v1234 = vmax.f32 %v1162, 0.0
  %v1235 = vmax.f32 %v1165, 0.0
  %v1236 = vmax.f32 %v1170, 0.0
  %v1237 = vmax.f32 %v1173, 0.0
  %v1238 = vmax.f32 %v1178, 0.0
  %v1239 = vmax.f32 %v1181, 0.0
  %v1240 = vmax.f32 %v1186, 0.0
  %v1241 = vmax.f32 %v1189, 0.0
  %v1242 = vmax.f32 %v1194, 0.0
  %v1243 = vmax.f32 %v1197, 0.0
  %v1244 = vmax.f32 %v1202, 0.0
  %v1245 = vmax.f32 %v1205, 0.0
  %v1246 = vmax.f32 %v1210, 0.0
  %v1247 = vmax.f32 %v1213, 0.0
  %v1248 = vpack.c.bf16 %v1217, %v1216
  %v1249 = vpack.c.bf16 %v1219, %v1218
  %v1250 = vpack.c.bf16 %v1221, %v1220
  %v1251 = vpack.c.bf16 %v1223, %v1222
  %v1252 = vpack.c.bf16 %v1225, %v1224
  %v1253 = vpack.c.bf16 %v1227, %v1226
  %v1254 = vpack.c.bf16 %v1229, %v1228
  %v1255 = vpack.c.bf16 %v1231, %v1230
  %v1256 = vpack.c.bf16 %v1233, %v1232
  %v1257 = vpack.c.bf16 %v1235, %v1234
  %v1258 = vpack.c.bf16 %v1237, %v1236
  %v1259 = vpack.c.bf16 %v1239, %v1238
  %v1260 = vpack.c.bf16 %v1241, %v1240
  %v1261 = vpack.c.bf16 %v1243, %v1242
  %v1262 = vpack.c.bf16 %v1245, %v1244
  %v1263 = vpack.c.bf16 %v1247, %v1246
  %v1264 = vld [vmem:[%s6] sm:$0xf]
  %v1265 = vld [vmem:[%s6 + $0x4] sm:$0xf]
  %v1266 = vld [vmem:[%s6 + $0x8] sm:$0xf]
  %v1267 = vld [vmem:[%s6 + $0xc] sm:$0xf]
  %v1268 = vld [vmem:[%s6 + $0x10] sm:$0xf]
  %v1269 = vld [vmem:[%s6 + $0x14] sm:$0xf]
  %v1270 = vld [vmem:[%s6 + $0x18] sm:$0xf]
  %v1271 = vld [vmem:[%s6 + $0x1c] sm:$0xf]
  %v1272 = vld [vmem:[%s6 + $0x20] sm:$0xf]
  %v1273 = vld [vmem:[%s6 + $0x24] sm:$0xf]
  %v1274 = vld [vmem:[%s6 + $0x28] sm:$0xf]
  %v1275 = vld [vmem:[%s6 + $0x2c] sm:$0xf]
  %v1276 = vld [vmem:[%s6 + $0x30] sm:$0xf]
  %v1277 = vld [vmem:[%s6 + $0x34] sm:$0xf]
  %v1278 = vld [vmem:[%s6 + $0x38] sm:$0xf]
  %v1279 = vld [vmem:[%s6 + $0x3c] sm:$0xf]
  %v1280 = vld [vmem:[%s7] sm:$0x1]
  %v1297 = vunpack.c.l.b16 %v1264
  %v1298 = vunpack.c.l.b16 %v1265
  %v1299 = vunpack.c.l.b16 %v1266
  %v1300 = vunpack.c.l.b16 %v1267
  %v1301 = vunpack.c.l.b16 %v1268
  %v1302 = vunpack.c.l.b16 %v1269
  %v1303 = vunpack.c.l.b16 %v1270
  %v1304 = vunpack.c.l.b16 %v1271
  %v1305 = vunpack.c.l.b16 %v1272
  %v1306 = vunpack.c.l.b16 %v1273
  %v1307 = vunpack.c.l.b16 %v1274
  %v1308 = vunpack.c.l.b16 %v1275
  %v1309 = vunpack.c.l.b16 %v1276
  %v1310 = vunpack.c.l.b16 %v1277
  %v1311 = vunpack.c.l.b16 %v1278
  %v1312 = vunpack.c.l.b16 %v1279
  %v1313 = vpack.c.b16 %v1298, %v1297
  %v1314 = vpack.c.b16 %v1300, %v1299
  %v1315 = vpack.c.b16 %v1302, %v1301
  %v1316 = vpack.c.b16 %v1304, %v1303
  %v1317 = vpack.c.b16 %v1306, %v1305
  %v1318 = vpack.c.b16 %v1308, %v1307
  %v1319 = vpack.c.b16 %v1310, %v1309
  %v1320 = vpack.c.b16 %v1312, %v1311
  %1329 = vmatprep.subr.bf16.mxu0 0
  %1330 = vmatpush1.bf16.msra.mxu0 %v1320
  %1331 = vmatprep.subr.bf16.mxu0 0
  %1332 = vmatpush1.bf16.msra.mxu0 %v1319
  %1333 = vmatprep.subr.bf16.mxu0 0
  %1334 = vmatpush1.bf16.msra.mxu0 %v1318
  %1335 = vmatprep.subr.bf16.mxu0 0
  %1336 = vmatpush1.bf16.msra.mxu0 %v1317
  %1337 = vmatprep.subr.bf16.mxu0 0
  %1338 = vmatpush1.bf16.msra.mxu0 %v1316
  %1339 = vmatprep.subr.bf16.mxu0 0
  %1340 = vmatpush1.bf16.msra.mxu0 %v1315
  %1341 = vmatprep.subr.bf16.mxu0 0
  %1342 = vmatpush1.bf16.msra.mxu0 %v1314
  %1343 = vmatprep.subr.bf16.mxu0 0
  %1344 = vmatpush1.bf16.msra.mxu0 %v1313
  %1345 = vmatprep.subr.bf16.mxu0 0
  %1346 = vmatpush2.bf16.msra.mxu0 0
  %1347 = vmatprep.subr.bf16.mxu0 0
  %1348 = vmatpush2.bf16.msra.mxu0 0
  %1349 = vmatprep.subr.bf16.mxu0 0
  %1350 = vmatpush2.bf16.msra.mxu0 0
  %1351 = vmatprep.subr.bf16.mxu0 0
  %1352 = vmatpush2.bf16.msra.mxu0 0
  %1353 = vmatprep.subr.bf16.mxu0 0
  %1354 = vmatpush2.bf16.msra.mxu0 0
  %1355 = vmatprep.subr.bf16.mxu0 0
  %1356 = vmatpush2.bf16.msra.mxu0 0
  %1357 = vmatprep.subr.bf16.mxu0 0
  %1358 = vmatpush2.bf16.msra.mxu0 0
  %1359 = vmatprep.subr.bf16.mxu0 0
  %1360 = vmatpush2.bf16.msra.mxu0 0
  %1361 = vmatprep.mubr.bf16.mxu0 0
  %1362 = vmatmul.mubr.bf16.gmra.mxu0 %v1248
  %v1363 = vpop.f32.mrf.mxu0
  %v1364 = vadd.f32 0.0, %v1363
  %v1365 = vpop.f32.mrf.mxu0
  %v1366 = vpop.f32.mrf.mxu0
  %v1367 = vadd.f32 0.0, %v1366
  %v1368 = vpop.f32.mrf.mxu0
  %1369 = vmatprep.mubr.bf16.mxu0 0
  %1370 = vmatmul.mubr.bf16.gmra.mxu0 %v1249
  %v1371 = vpop.f32.mrf.mxu0
  %v1372 = vadd.f32 0.0, %v1371
  %v1373 = vpop.f32.mrf.mxu0
  %v1374 = vpop.f32.mrf.mxu0
  %v1375 = vadd.f32 0.0, %v1374
  %v1376 = vpop.f32.mrf.mxu0
  %1377 = vmatprep.mubr.bf16.mxu0 0
  %1378 = vmatmul.mubr.bf16.gmra.mxu0 %v1250
  %v1379 = vpop.f32.mrf.mxu0
  %v1380 = vadd.f32 0.0, %v1379
  %v1381 = vpop.f32.mrf.mxu0
  %v1382 = vpop.f32.mrf.mxu0
  %v1383 = vadd.f32 0.0, %v1382
  %v1384 = vpop.f32.mrf.mxu0
  %1385 = vmatprep.mubr.bf16.mxu0 0
  %1386 = vmatmul.mubr.bf16.gmra.mxu0 %v1251
  %v1387 = vpop.f32.mrf.mxu0
  %v1388 = vadd.f32 0.0, %v1387
  %v1389 = vpop.f32.mrf.mxu0
  %v1390 = vpop.f32.mrf.mxu0
  %v1391 = vadd.f32 0.0, %v1390
  %v1392 = vpop.f32.mrf.mxu0
  %1393 = vmatprep.mubr.bf16.mxu0 0
  %1394 = vmatmul.mubr.bf16.gmra.mxu0 %v1252
  %v1395 = vpop.f32.mrf.mxu0
  %v1396 = vadd.f32 0.0, %v1395
  %v1397 = vpop.f32.mrf.mxu0
  %v1398 = vpop.f32.mrf.mxu0
  %v1399 = vadd.f32 0.0, %v1398
  %v1400 = vpop.f32.mrf.mxu0
  %1401 = vmatprep.mubr.bf16.mxu0 0
  %1402 = vmatmul.mubr.bf16.gmra.mxu0 %v1253
  %v1403 = vpop.f32.mrf.mxu0
  %v1404 = vadd.f32 0.0, %v1403
  %v1405 = vpop.f32.mrf.mxu0
  %v1406 = vpop.f32.mrf.mxu0
  %v1407 = vadd.f32 0.0, %v1406
  %v1408 = vpop.f32.mrf.mxu0
  %1409 = vmatprep.mubr.bf16.mxu0 0
  %1410 = vmatmul.mubr.bf16.gmra.mxu0 %v1254
  %v1411 = vpop.f32.mrf.mxu0
  %v1412 = vadd.f32 0.0, %v1411
  %v1413 = vpop.f32.mrf.mxu0
  %v1414 = vpop.f32.mrf.mxu0
  %v1415 = vadd.f32 0.0, %v1414
  %v1416 = vpop.f32.mrf.mxu0
  %1417 = vmatprep.mubr.bf16.mxu0 0
  %1418 = vmatmul.mubr.bf16.gmra.mxu0 %v1255
  %v1419 = vpop.f32.mrf.mxu0
  %v1420 = vadd.f32 0.0, %v1419
  %v1421 = vpop.f32.mrf.mxu0
  %v1422 = vpop.f32.mrf.mxu0
  %v1423 = vadd.f32 0.0, %v1422
  %v1424 = vpop.f32.mrf.mxu0
  %1425 = vmatprep.mubr.bf16.mxu0 0
  %1426 = vmatmul.mubr.bf16.gmra.mxu0 %v1256
  %v1427 = vpop.f32.mrf.mxu0
  %v1428 = vadd.f32 0.0, %v1427
  %v1429 = vpop.f32.mrf.mxu0
  %v1430 = vpop.f32.mrf.mxu0
  %v1431 = vadd.f32 0.0, %v1430
  %v1432 = vpop.f32.mrf.mxu0
  %1433 = vmatprep.mubr.bf16.mxu0 0
  %1434 = vmatmul.mubr.bf16.gmra.mxu0 %v1257
  %v1435 = vpop.f32.mrf.mxu0
  %v1436 = vadd.f32 0.0, %v1435
  %v1437 = vpop.f32.mrf.mxu0
  %v1438 = vpop.f32.mrf.mxu0
  %v1439 = vadd.f32 0.0, %v1438
  %v1440 = vpop.f32.mrf.mxu0
  %1441 = vmatprep.mubr.bf16.mxu0 0
  %1442 = vmatmul.mubr.bf16.gmra.mxu0 %v1258
  %v1443 = vpop.f32.mrf.mxu0
  %v1444 = vadd.f32 0.0, %v1443
  %v1445 = vpop.f32.mrf.mxu0
  %v1446 = vpop.f32.mrf.mxu0
  %v1447 = vadd.f32 0.0, %v1446
  %v1448 = vpop.f32.mrf.mxu0
  %1449 = vmatprep.mubr.bf16.mxu0 0
  %1450 = vmatmul.mubr.bf16.gmra.mxu0 %v1259
  %v1451 = vpop.f32.mrf.mxu0
  %v1452 = vadd.f32 0.0, %v1451
  %v1453 = vpop.f32.mrf.mxu0
  %v1454 = vpop.f32.mrf.mxu0
  %v1455 = vadd.f32 0.0, %v1454
  %v1456 = vpop.f32.mrf.mxu0
  %1457 = vmatprep.mubr.bf16.mxu0 0
  %1458 = vmatmul.mubr.bf16.gmra.mxu0 %v1260
  %v1459 = vpop.f32.mrf.mxu0
  %v1460 = vadd.f32 0.0, %v1459
  %v1461 = vpop.f32.mrf.mxu0
  %v1462 = vpop.f32.mrf.mxu0
  %v1463 = vadd.f32 0.0, %v1462
  %v1464 = vpop.f32.mrf.mxu0
  %1465 = vmatprep.mubr.bf16.mxu0 0
  %1466 = vmatmul.mubr.bf16.gmra.mxu0 %v1261
  %v1467 = vpop.f32.mrf.mxu0
  %v1468 = vadd.f32 0.0, %v1467
  %v1469 = vpop.f32.mrf.mxu0
  %v1470 = vpop.f32.mrf.mxu0
  %v1471 = vadd.f32 0.0, %v1470
  %v1472 = vpop.f32.mrf.mxu0
  %1473 = vmatprep.mubr.bf16.mxu0 0
  %1474 = vmatmul.mubr.bf16.gmra.mxu0 %v1262
  %v1475 = vpop.f32.mrf.mxu0
  %v1476 = vadd.f32 0.0, %v1475
  %v1477 = vpop.f32.mrf.mxu0
  %v1478 = vpop.f32.mrf.mxu0
  %v1479 = vadd.f32 0.0, %v1478
  %v1480 = vpop.f32.mrf.mxu0
  %1481 = vmatprep.mubr.bf16.mxu0 0
  %1482 = vmatmul.mubr.bf16.gmra.mxu0 %v1263
  %v1483 = vpop.f32.mrf.mxu0
  %v1484 = vadd.f32 0.0, %v1483
  %v1485 = vpop.f32.mrf.mxu0
  %v1486 = vpop.f32.mrf.mxu0
  %v1487 = vadd.f32 0.0, %v1486
  %v1488 = vpop.f32.mrf.mxu0
  %1489 = vdwg.mxu0
  %v1490 = vpack.c.bf16 %v1367, %v1364
  %v1491 = vpack.c.bf16 %v1375, %v1372
  %v1492 = vpack.c.bf16 %v1383, %v1380
  %v1493 = vpack.c.bf16 %v1391, %v1388
  %v1494 = vpack.c.bf16 %v1399, %v1396
  %v1495 = vpack.c.bf16 %v1407, %v1404
  %v1496 = vpack.c.bf16 %v1415, %v1412
  %v1497 = vpack.c.bf16 %v1423, %v1420
  %v1498 = vpack.c.bf16 %v1431, %v1428
  %v1499 = vpack.c.bf16 %v1439, %v1436
  %v1500 = vpack.c.bf16 %v1447, %v1444
  %v1501 = vpack.c.bf16 %v1455, %v1452
  %v1502 = vpack.c.bf16 %v1463, %v1460
  %v1503 = vpack.c.bf16 %v1471, %v1468
  %v1504 = vpack.c.bf16 %v1479, %v1476
  %v1505 = vpack.c.bf16 %v1487, %v1484
  %v1507 = vlaneseq
  %v1508 = vshrl.u32 %v1507, 7
  %v1509 = vsub.s32 0, %v1508
  %v1510 = vrot.slane %v1280, %v1509
  %1512 = vmatprep.subr.bf16.mxu0 0
  %1513 = vmatpush1.bf16.msra.mxu0 %v1497
  %1514 = vmatprep.subr.bf16.mxu0 0
  %1515 = vmatpush1.bf16.msra.mxu0 %v1496
  %1516 = vmatprep.subr.bf16.mxu0 0
  %1517 = vmatpush1.bf16.msra.mxu0 %v1495
  %1518 = vmatprep.subr.bf16.mxu0 0
  %1519 = vmatpush1.bf16.msra.mxu0 %v1494
  %1520 = vmatprep.subr.bf16.mxu0 0
  %1521 = vmatpush1.bf16.msra.mxu0 %v1493
  %1522 = vmatprep.subr.bf16.mxu0 0
  %1523 = vmatpush1.bf16.msra.mxu0 %v1492
  %1524 = vmatprep.subr.bf16.mxu0 0
  %1525 = vmatpush1.bf16.msra.mxu0 %v1491
  %1526 = vmatprep.subr.bf16.mxu0 0
  %1527 = vmatpush1.bf16.msra.mxu0 %v1490
  %1528 = vmatprep.subr.bf16.mxu0 0
  %1529 = vmatpush2.bf16.msra.mxu0 %v1505
  %1530 = vmatprep.subr.bf16.mxu0 0
  %1531 = vmatpush2.bf16.msra.mxu0 %v1504
  %1532 = vmatprep.subr.bf16.mxu0 0
  %1533 = vmatpush2.bf16.msra.mxu0 %v1503
  %1534 = vmatprep.subr.bf16.mxu0 0
  %1535 = vmatpush2.bf16.msra.mxu0 %v1502
  %1536 = vmatprep.subr.bf16.mxu0 0
  %1537 = vmatpush2.bf16.msra.mxu0 %v1501
  %1538 = vmatprep.subr.bf16.mxu0 0
  %1539 = vmatpush2.bf16.msra.mxu0 %v1500
  %1540 = vmatprep.subr.bf16.mxu0 0
  %1541 = vmatpush2.bf16.msra.mxu0 %v1499
  %1542 = vmatprep.subr.bf16.mxu0 0
  %1543 = vmatpush2.bf16.msra.mxu0 %v1498
  %1544 = vmatprep.mubr.bf16.mxu0 %v535
  %1545 = vmatmul.mubr.bf16.gmra.mxu0 %v534
  %v1546 = vpop.f32.mrf.mxu0
  %v1547 = vadd.f32 %v1510, %v1546
  %v1548 = vpop.f32.mrf.mxu0
  %v1549 = vpop.f32.mrf.mxu0
  %v1550 = vadd.f32 %v1510, %v1549
  %v1551 = vpop.f32.mrf.mxu0
  %1552 = vmatprep.mubr.bf16.mxu0 %v537
  %1553 = vmatmul.mubr.bf16.gmra.mxu0 %v536
  %v1554 = vpop.f32.mrf.mxu0
  %v1555 = vadd.f32 %v1510, %v1554
  %v1556 = vpop.f32.mrf.mxu0
  %v1557 = vpop.f32.mrf.mxu0
  %v1558 = vadd.f32 %v1510, %v1557
  %v1559 = vpop.f32.mrf.mxu0
  %1560 = vmatprep.mubr.bf16.mxu0 %v539
  %1561 = vmatmul.mubr.bf16.gmra.mxu0 %v538
  %v1562 = vpop.f32.mrf.mxu0
  %v1563 = vadd.f32 %v1510, %v1562
  %v1564 = vpop.f32.mrf.mxu0
  %v1565 = vpop.f32.mrf.mxu0
  %v1566 = vadd.f32 %v1510, %v1565
  %v1567 = vpop.f32.mrf.mxu0
  %1568 = vmatprep.mubr.bf16.mxu0 %v541
  %1569 = vmatmul.mubr.bf16.gmra.mxu0 %v540
  %v1570 = vpop.f32.mrf.mxu0
  %v1571 = vadd.f32 %v1510, %v1570
  %v1572 = vpop.f32.mrf.mxu0
  %v1573 = vpop.f32.mrf.mxu0
  %v1574 = vadd.f32 %v1510, %v1573
  %v1575 = vpop.f32.mrf.mxu0
  %1576 = vmatprep.mubr.bf16.mxu0 %v543
  %1577 = vmatmul.mubr.bf16.gmra.mxu0 %v542
  %v1578 = vpop.f32.mrf.mxu0
  %v1579 = vadd.f32 %v1510, %v1578
  %v1580 = vpop.f32.mrf.mxu0
  %v1581 = vpop.f32.mrf.mxu0
  %v1582 = vadd.f32 %v1510, %v1581
  %v1583 = vpop.f32.mrf.mxu0
  %1584 = vmatprep.mubr.bf16.mxu0 %v545
  %1585 = vmatmul.mubr.bf16.gmra.mxu0 %v544
  %v1586 = vpop.f32.mrf.mxu0
  %v1587 = vadd.f32 %v1510, %v1586
  %v1588 = vpop.f32.mrf.mxu0
  %v1589 = vpop.f32.mrf.mxu0
  %v1590 = vadd.f32 %v1510, %v1589
  %v1591 = vpop.f32.mrf.mxu0
  %1592 = vmatprep.mubr.bf16.mxu0 %v547
  %1593 = vmatmul.mubr.bf16.gmra.mxu0 %v546
  %v1594 = vpop.f32.mrf.mxu0
  %v1595 = vadd.f32 %v1510, %v1594
  %v1596 = vpop.f32.mrf.mxu0
  %v1597 = vpop.f32.mrf.mxu0
  %v1598 = vadd.f32 %v1510, %v1597
  %v1599 = vpop.f32.mrf.mxu0
  %1600 = vmatprep.mubr.bf16.mxu0 %v549
  %1601 = vmatmul.mubr.bf16.gmra.mxu0 %v548
  %v1602 = vpop.f32.mrf.mxu0
  %v1603 = vadd.f32 %v1510, %v1602
  %v1604 = vpop.f32.mrf.mxu0
  %v1605 = vpop.f32.mrf.mxu0
  %v1606 = vadd.f32 %v1510, %v1605
  %v1607 = vpop.f32.mrf.mxu0
  %1608 = vmatprep.mubr.bf16.mxu0 %v551
  %1609 = vmatmul.mubr.bf16.gmra.mxu0 %v550
  %v1610 = vpop.f32.mrf.mxu0
  %v1611 = vadd.f32 %v1510, %v1610
  %v1612 = vpop.f32.mrf.mxu0
  %v1613 = vpop.f32.mrf.mxu0
  %v1614 = vadd.f32 %v1510, %v1613
  %v1615 = vpop.f32.mrf.mxu0
  %1616 = vmatprep.mubr.bf16.mxu0 %v553
  %1617 = vmatmul.mubr.bf16.gmra.mxu0 %v552
  %v1618 = vpop.f32.mrf.mxu0
  %v1619 = vadd.f32 %v1510, %v1618
  %v1620 = vpop.f32.mrf.mxu0
  %v1621 = vpop.f32.mrf.mxu0
  %v1622 = vadd.f32 %v1510, %v1621
  %v1623 = vpop.f32.mrf.mxu0
  %1624 = vmatprep.mubr.bf16.mxu0 %v555
  %1625 = vmatmul.mubr.bf16.gmra.mxu0 %v554
  %v1626 = vpop.f32.mrf.mxu0
  %v1627 = vadd.f32 %v1510, %v1626
  %v1628 = vpop.f32.mrf.mxu0
  %v1629 = vpop.f32.mrf.mxu0
  %v1630 = vadd.f32 %v1510, %v1629
  %v1631 = vpop.f32.mrf.mxu0
  %1632 = vmatprep.mubr.bf16.mxu0 %v557
  %1633 = vmatmul.mubr.bf16.gmra.mxu0 %v556
  %v1634 = vpop.f32.mrf.mxu0
  %v1635 = vadd.f32 %v1510, %v1634
  %v1636 = vpop.f32.mrf.mxu0
  %v1637 = vpop.f32.mrf.mxu0
  %v1638 = vadd.f32 %v1510, %v1637
  %v1639 = vpop.f32.mrf.mxu0
  %1640 = vmatprep.mubr.bf16.mxu0 %v559
  %1641 = vmatmul.mubr.bf16.gmra.mxu0 %v558
  %v1642 = vpop.f32.mrf.mxu0
  %v1643 = vadd.f32 %v1510, %v1642
  %v1644 = vpop.f32.mrf.mxu0
  %v1645 = vpop.f32.mrf.mxu0
  %v1646 = vadd.f32 %v1510, %v1645
  %v1647 = vpop.f32.mrf.mxu0
  %1648 = vmatprep.mubr.bf16.mxu0 %v561
  %1649 = vmatmul.mubr.bf16.gmra.mxu0 %v560
  %v1650 = vpop.f32.mrf.mxu0
  %v1651 = vadd.f32 %v1510, %v1650
  %v1652 = vpop.f32.mrf.mxu0
  %v1653 = vpop.f32.mrf.mxu0
  %v1654 = vadd.f32 %v1510, %v1653
  %v1655 = vpop.f32.mrf.mxu0
  %1656 = vmatprep.mubr.bf16.mxu0 %v563
  %1657 = vmatmul.mubr.bf16.gmra.mxu0 %v562
  %v1658 = vpop.f32.mrf.mxu0
  %v1659 = vadd.f32 %v1510, %v1658
  %v1660 = vpop.f32.mrf.mxu0
  %v1661 = vpop.f32.mrf.mxu0
  %v1662 = vadd.f32 %v1510, %v1661
  %v1663 = vpop.f32.mrf.mxu0
  %1664 = vmatprep.mubr.bf16.mxu0 %v565
  %1665 = vmatmul.mubr.bf16.gmra.mxu0 %v564
  %v1666 = vpop.f32.mrf.mxu0
  %v1667 = vadd.f32 %v1510, %v1666
  %v1668 = vpop.f32.mrf.mxu0
  %v1669 = vpop.f32.mrf.mxu0
  %v1670 = vadd.f32 %v1510, %v1669
  %v1671 = vpop.f32.mrf.mxu0
  %1672 = vdwg.mxu0
  %1673 = vst [vmem:[%s8] sm:$0xff] %v1547
  %1674 = vst [vmem:[%s8 + $0x8] sm:$0xff] %v1550
  %1675 = vst [vmem:[%s8 + $0x10] sm:$0xff] %v1555
  %1676 = vst [vmem:[%s8 + $0x18] sm:$0xff] %v1558
  %1677 = vst [vmem:[%s8 + $0x20] sm:$0xff] %v1563
  %1678 = vst [vmem:[%s8 + $0x28] sm:$0xff] %v1566
  %1679 = vst [vmem:[%s8 + $0x30] sm:$0xff] %v1571
  %1680 = vst [vmem:[%s8 + $0x38] sm:$0xff] %v1574
  %1681 = vst [vmem:[%s8 + $0x40] sm:$0xff] %v1579
  %1682 = vst [vmem:[%s8 + $0x48] sm:$0xff] %v1582
  %1683 = vst [vmem:[%s8 + $0x50] sm:$0xff] %v1587
  %1684 = vst [vmem:[%s8 + $0x58] sm:$0xff] %v1590
  %1685 = vst [vmem:[%s8 + $0x60] sm:$0xff] %v1595
  %1686 = vst [vmem:[%s8 + $0x68] sm:$0xff] %v1598
  %1687 = vst [vmem:[%s8 + $0x70] sm:$0xff] %v1603
  %1688 = vst [vmem:[%s8 + $0x78] sm:$0xff] %v1606
  %1689 = vst [vmem:[%s8 + $0x80] sm:$0xff] %v1611
  %1690 = vst [vmem:[%s8 + $0x88] sm:$0xff] %v1614
  %1691 = vst [vmem:[%s8 + $0x90] sm:$0xff] %v1619
  %1692 = vst [vmem:[%s8 + $0x98] sm:$0xff] %v1622
  %1693 = vst [vmem:[%s8 + $0xa0] sm:$0xff] %v1627
  %1694 = vst [vmem:[%s8 + $0xa8] sm:$0xff] %v1630
  %1695 = vst [vmem:[%s8 + $0xb0] sm:$0xff] %v1635
  %1696 = vst [vmem:[%s8 + $0xb8] sm:$0xff] %v1638
  %1697 = vst [vmem:[%s8 + $0xc0] sm:$0xff] %v1643
  %1698 = vst [vmem:[%s8 + $0xc8] sm:$0xff] %v1646
  %1699 = vst [vmem:[%s8 + $0xd0] sm:$0xff] %v1651
  %1700 = vst [vmem:[%s8 + $0xd8] sm:$0xff] %v1654
  %1701 = vst [vmem:[%s8 + $0xe0] sm:$0xff] %v1659
  %1702 = vst [vmem:[%s8 + $0xe8] sm:$0xff] %v1662
  %1703 = vst [vmem:[%s8 + $0xf0] sm:$0xff] %v1667
  %1704 = vst [vmem:[%s8 + $0xf8] sm:$0xff] %v1670
  // Predicated region
  $region34: #{gcn_forward.1} parent=0 // pred_check
    _
  $region35: #{gcn_forward.1} parent=0 // pred_check_branch
    %1706 = sbr.rel (0) target = $region37
  $region36: #{gcn_forward.1} parent=0 // pred_region
    _
  $region37: #{gcn_forward.1} parent=0 // pred_fallthru
    _
  // Predicated region
  $region38: #{gcn_forward.1} parent=0 // pred_check
    _
  $region39: #{gcn_forward.1} parent=0 // pred_check_branch
    %1708 = sbr.rel (0) target = $region41
  $region40: #{gcn_forward.1} parent=0 // pred_region
    _
  $region41: #{gcn_forward.1} parent=0 // pred_fallthru
    _

</llo_original>
